<compile_context>
chip_gen: v7x
topology: tpu7x:2x2x1
jax: 0.10.0
libtpu: 0.0.40
codegen_flags: <defaults>
</compile_context>

<pallas_src>
import jax
import jax.numpy as jnp
from jax.experimental import pallas as pl
from jax.experimental.pallas import tpu as pltpu


def _mean_conv_kernel(x_ref, w_ref, b_ref, o_ref):
    # x_ref : (Bt, K)    lane-dense flattened activations, K = Cin*HW
    # w_ref : (K, Cout)  1x1-conv weight expanded over HW, 1/HW folded in
    # b_ref : (1, Cout)  bias (f32)
    # o_ref : (Bt, Cout)
    y = jnp.dot(x_ref[...], w_ref[...], preferred_element_type=jnp.float32)
    y = y + b_ref[...]
    o_ref[...] = y.astype(o_ref.dtype)


def _round_up(x, m):
    return ((x + m - 1) // m) * m


def _choose_batch_tile(n, k, itemsize, vmem_budget_bytes=8 << 20):
    """Largest batch tile whose double-buffered input fits the VMEM budget.

    Keeps >=2 grid steps for larger batches (v7x megacore has 2 TCs) and keeps
    the tile a multiple of 8 sublanes whenever it is smaller than the batch.
    """
    bt_cap = max(8, (vmem_budget_bytes // (2 * k * itemsize)) // 8 * 8)
    if n < 16 and n <= bt_cap:
        return n, n                      # one step; block == full batch dim
    bt = min(bt_cap, _round_up(max(n // 2, 1), 8))
    return bt, _round_up(n, bt)


def mean_conv2d(x_nchw, weight, bias):
    """Fused global-average-pool + 1x1 conv.

    x_nchw: (N, Cin, H, W); weight: (Cout, Cin, 1, 1); bias: (Cout,)
    returns (N, Cout, 1, 1) in x's dtype.
    """
    N, Cin, H, W = x_nchw.shape
    Cout = weight.shape[0]
    HW = H * W
    K = Cin * HW

    # mean((2,3)) then 1x1 conv == one matmul:
    #   y[n, o] = sum_k x_flat[n, k] * W_big[k, o] + b[o]
    # with W_big[c*HW + hw, o] = W[o, c] / HW   (scaling done in f32).
    x_flat = x_nchw.reshape(N, K)
    w_scaled = weight.reshape(Cout, Cin).astype(jnp.float32).T / HW   # (Cin, Cout)
    w_big = jnp.repeat(w_scaled, HW, axis=0).astype(x_nchw.dtype)     # (K, Cout)
    b2 = bias.astype(jnp.float32).reshape(1, Cout)

    bt, n_pad = _choose_batch_tile(N, K, jnp.dtype(x_nchw.dtype).itemsize)
    if n_pad != N:
        x_flat = jnp.pad(x_flat, ((0, n_pad - N), (0, 0)))

    out = pl.pallas_call(
        _mean_conv_kernel,
        out_shape=jax.ShapeDtypeStruct((n_pad, Cout), x_nchw.dtype),
        grid_spec=pltpu.PrefetchScalarGridSpec(
            num_scalar_prefetch=0,
            grid=(n_pad // bt,),
            in_specs=[
                pl.BlockSpec((bt, K), lambda i: (i, 0)),
                pl.BlockSpec((K, Cout), lambda i: (0, 0)),
                pl.BlockSpec((1, Cout), lambda i: (0, 0)),
            ],
            out_specs=pl.BlockSpec((bt, Cout), lambda i: (i, 0)),
        ),
        compiler_params=pltpu.CompilerParams(
            dimension_semantics=("parallel",)),
    )(x_flat, w_big, b2)

    return out[:N].reshape(N, Cout, 1, 1)


if __name__ == "__main__":
    # Small shapes consistent with the module: Conv2d(96, 4, 1x1) forces Cin=96.
    N, Cin, H, W = 2, 96, 8, 8
    Cout = 4

    key = jax.random.PRNGKey(0)
    kx, kw, kb = jax.random.split(key, 3)
    x = jax.random.normal(kx, (N, Cin, H, W), dtype=jnp.float32)
    # Deterministic parameter init (synthetic; shapes match Conv2d(96,4,1,1)).
    weight = jax.random.normal(kw, (Cout, Cin, 1, 1), dtype=jnp.float32) * 0.05
    bias = jax.random.normal(kb, (Cout,), dtype=jnp.float32) * 0.05

    y = mean_conv2d(x, weight, bias)
    y = jax.block_until_ready(y)

    # Pure-JAX reference (mean then 1x1 conv) for sanity check.
    ref = jnp.einsum("nc,oc->no", x.mean(axis=(2, 3)),
                     weight.reshape(Cout, Cin),
                     precision=jax.lax.Precision.HIGHEST) + bias
    ref = ref.reshape(N, Cout, 1, 1)
    assert y.shape == (N, Cout, 1, 1)
    assert jnp.allclose(y, ref, atol=1e-4, rtol=1e-4)

    print("KERNEL_OK")
</pallas_src>

<mosaic_0001>
module attributes {stable_mosaic.version = 11 : i64} {
  func.func @_mean_conv_kernel(%arg0: i32, %arg1: memref<2x6144xf32, #tpu.memory_space<vmem>>, %arg2: memref<6144x4xf32, #tpu.memory_space<vmem>>, %arg3: memref<1x4xf32, #tpu.memory_space<vmem>>, %arg4: memref<2x4xf32, #tpu.memory_space<vmem>>) attributes {dimension_semantics = [#tpu.dimension_semantics<parallel>], iteration_bounds = array<i64: 1>, scalar_prefetch = 0 : i64, scratch_operands = 0 : i64, tpu.core_type = #tpu.core_type<tc>, window_params = [{transform_indices = @transform_0, window_bounds = array<i64: 2, 6144>}, {pipeline_mode = #tpu.pipeline_mode<synchronous>, transform_indices = @transform_1, window_bounds = array<i64: 6144, 4>}, {pipeline_mode = #tpu.pipeline_mode<synchronous>, transform_indices = @transform_2, window_bounds = array<i64: 1, 4>}, {transform_indices = @transform_3, window_bounds = array<i64: 2, 4>}]} {
    %c0 = arith.constant 0 : index
    %c0_0 = arith.constant 0 : index
    %0 = vector.load %arg1[%c0, %c0_0] : memref<2x6144xf32, #tpu.memory_space<vmem>>, vector<2x6144xf32>
    %c0_1 = arith.constant 0 : index
    %c0_2 = arith.constant 0 : index
    %1 = vector.load %arg2[%c0_1, %c0_2] : memref<6144x4xf32, #tpu.memory_space<vmem>>, vector<6144x4xf32>
    %cst = arith.constant dense<0.000000e+00> : vector<2x4xf32>
    %2 = tpu.matmul %0, %1, %cst {dimension_numbers = #tpu.dot_dimension_numbers<[1], [0], [0], [1], [0, 0, 1, 1], [], []>} : vector<2x6144xf32>, vector<6144x4xf32>, vector<2x4xf32> -> vector<2x4xf32>
    %c0_3 = arith.constant 0 : index
    %c0_4 = arith.constant 0 : index
    %3 = vector.load %arg3[%c0_3, %c0_4] : memref<1x4xf32, #tpu.memory_space<vmem>>, vector<1x4xf32>
    %4 = vector.broadcast %3 : vector<1x4xf32> to vector<2x4xf32>
    %5 = arith.addf %2, %4 : vector<2x4xf32>
    %c0_5 = arith.constant 0 : index
    %c0_6 = arith.constant 0 : index
    %6 = vector.load %arg4[%c0_5, %c0_6] : memref<2x4xf32, #tpu.memory_space<vmem>>, vector<2x4xf32>
    tpu.vector_store %arg4[%c0_5, %c0_6], %5 {strides = array<i32>} : memref<2x4xf32, #tpu.memory_space<vmem>>, vector<2x4xf32>,
    return
  }
  func.func @transform_0(%arg0: i32) -> (i32, i32) {
    %c0_i32 = arith.constant 0 : i32
    %c0_i32_0 = arith.constant 0 : i32
    return %arg0, %c0_i32 : i32, i32
  }
  func.func @transform_1(%arg0: i32) -> (i32, i32) {
    %c0_i32 = arith.constant 0 : i32
    %c0_i32_0 = arith.constant 0 : i32
    %c0_i32_1 = arith.constant 0 : i32
    return %c0_i32, %c0_i32_0 : i32, i32
  }
  func.func @transform_2(%arg0: i32) -> (i32, i32) {
    %c0_i32 = arith.constant 0 : i32
    %c0_i32_0 = arith.constant 0 : i32
    %c0_i32_1 = arith.constant 0 : i32
    return %c0_i32, %c0_i32_0 : i32, i32
  }
  func.func @transform_3(%arg0: i32) -> (i32, i32) {
    %c0_i32 = arith.constant 0 : i32
    %c0_i32_0 = arith.constant 0 : i32
    return %arg0, %c0_i32 : i32, i32
  }
}

</mosaic_0001>

<llo_original>
// kernel: tpu_custom_call.1
$region0: #{tpu_custom_call.1}
  #allocation0 [shape = 'u32[]', space=smem, size = 0x4, offset = 0x4, fixed_abs, tag = 'smem constant byte address 0x4 - core index']
  #allocation1 [shape = 'u32[144,128]{1,0:T(1,128)}', space=vmem, size = 0x12000, scoped, tag = 'internal scratch']
  %s0 = inlined_call_operand.vmem [shape: f32[2,6144], index: 0, kind: input, shape index: {}]
  %s1 = inlined_call_operand.vmem [shape: f32[6144,4], index: 1, kind: input, shape index: {}]
  %s2 = inlined_call_operand.vmem [shape: f32[1,4], index: 2, kind: input, shape index: {}]
  %s3 = inlined_call_operand.hbm [shape: f32[2,4], index: 3, kind: output, shape index: {}]
  %s4 = sld [smem:[#allocation0]]
  $region22: #{tpu_custom_call.1} parent=0
    _
  %s6 = ssub.s32 1, %s4
  %s7 = scalar_select 0, %s6, %s4
  $region1: #{tpu_custom_call.1} parent=0
    #allocation2 [shape = 'u8[1024]{0}', space=vmem, size = 0x400, scoped, tag = 'output window, operand 0, single buffered']
    #allocation3 [shape = 's32[1]{0}', space=sflag, size = 0x4, scoped, tag = 'scoped memory for tpu_custom_call.1']
    %8 = vsyncpa [#allocation3], 0
    // Predicated region
    $region2: #{tpu_custom_call.1} parent=1 // pred_check
      _
    $region3: #{tpu_custom_call.1} parent=1 // pred_check_branch
      %10 = sbr.rel (0) target = $region5
    $region4: #{tpu_custom_call.1} parent=1 // pred_region
      _
    $region5: #{tpu_custom_call.1} parent=1 // pred_fallthru
      _
    // Predicated region
    $region6: #{tpu_custom_call.1} parent=1 // pred_check
      _
    $region7: #{tpu_custom_call.1} parent=1 // pred_check_branch
      %12 = sbr.rel (0) target = $region9
    $region8: #{tpu_custom_call.1} parent=1 // pred_region
      _
    $region9: #{tpu_custom_call.1} parent=1 // pred_fallthru
      _
    // Predicated region
    $region10: #{tpu_custom_call.1} parent=1 // pred_check
      _
    $region11: #{tpu_custom_call.1} parent=1 // pred_check_branch
      %14 = sbr.rel (0) target = $region13
    $region12: #{tpu_custom_call.1} parent=1 // pred_region
      _
    $region13: #{tpu_custom_call.1} parent=1 // pred_fallthru
      _
    %v15 = vld [vmem:[%s0] sm:$0xff]
    %v16 = vld [vmem:[%s0 + $0x8] sm:$0xff]
    %v17 = vld [vmem:[%s0 + $0x10] sm:$0xff]
    %v18 = vld [vmem:[%s0 + $0x18] sm:$0xff]
    %v19 = vld [vmem:[%s0 + $0x20] sm:$0xff]
    %v20 = vld [vmem:[%s0 + $0x28] sm:$0xff]
    %v21 = vld [vmem:[%s0 + $0x30] sm:$0xff]
    %v22 = vld [vmem:[%s0 + $0x38] sm:$0xff]
    %v23 = vld [vmem:[%s0 + $0x40] sm:$0xff]
    %v24 = vld [vmem:[%s0 + $0x48] sm:$0xff]
    %v25 = vld [vmem:[%s0 + $0x50] sm:$0xff]
    %v26 = vld [vmem:[%s0 + $0x58] sm:$0xff]
    %v27 = vld [vmem:[%s1] sm:$0xff]
    %v28 = vld [vmem:[%s1 + $0x8] sm:$0xff]
    %v29 = vld [vmem:[%s1 + $0x10] sm:$0xff]
    %v30 = vld [vmem:[%s1 + $0x18] sm:$0xff]
    %v31 = vld [vmem:[%s1 + $0x20] sm:$0xff]
    %v32 = vld [vmem:[%s1 + $0x28] sm:$0xff]
    %v33 = vld [vmem:[%s1 + $0x30] sm:$0xff]
    %v34 = vld [vmem:[%s1 + $0x38] sm:$0xff]
    %v35 = vld [vmem:[%s1 + $0x40] sm:$0xff]
    %v36 = vld [vmem:[%s1 + $0x48] sm:$0xff]
    %v37 = vld [vmem:[%s1 + $0x50] sm:$0xff]
    %v38 = vld [vmem:[%s1 + $0x58] sm:$0xff]
    %v39 = vld [vmem:[%s1 + $0x60] sm:$0xff]
    %v40 = vld [vmem:[%s1 + $0x68] sm:$0xff]
    %v41 = vld [vmem:[%s1 + $0x70] sm:$0xff]
    %v42 = vld [vmem:[%s1 + $0x78] sm:$0xff]
    %v43 = vld [vmem:[%s1 + $0x80] sm:$0xff]
    %v44 = vld [vmem:[%s1 + $0x88] sm:$0xff]
    %v45 = vld [vmem:[%s1 + $0x90] sm:$0xff]
    %v46 = vld [vmem:[%s1 + $0x98] sm:$0xff]
    %v47 = vld [vmem:[%s1 + $0xa0] sm:$0xff]
    %v48 = vld [vmem:[%s1 + $0xa8] sm:$0xff]
    %v49 = vld [vmem:[%s1 + $0xb0] sm:$0xff]
    %v50 = vld [vmem:[%s1 + $0xb8] sm:$0xff]
    %v51 = vld [vmem:[%s1 + $0xc0] sm:$0xff]
    %v52 = vld [vmem:[%s1 + $0xc8] sm:$0xff]
    %v53 = vld [vmem:[%s1 + $0xd0] sm:$0xff]
    %v54 = vld [vmem:[%s1 + $0xd8] sm:$0xff]
    %v55 = vld [vmem:[%s1 + $0xe0] sm:$0xff]
    %v56 = vld [vmem:[%s1 + $0xe8] sm:$0xff]
    %v57 = vld [vmem:[%s1 + $0xf0] sm:$0xff]
    %v58 = vld [vmem:[%s1 + $0xf8] sm:$0xff]
    %v59 = vld [vmem:[%s1 + $0x100] sm:$0xff]
    %v60 = vld [vmem:[%s1 + $0x108] sm:$0xff]
    %v61 = vld [vmem:[%s1 + $0x110] sm:$0xff]
    %v62 = vld [vmem:[%s1 + $0x118] sm:$0xff]
    %v63 = vld [vmem:[%s1 + $0x120] sm:$0xff]
    %v64 = vld [vmem:[%s1 + $0x128] sm:$0xff]
    %v65 = vld [vmem:[%s1 + $0x130] sm:$0xff]
    %v66 = vld [vmem:[%s1 + $0x138] sm:$0xff]
    %v67 = vld [vmem:[%s1 + $0x140] sm:$0xff]
    %v68 = vld [vmem:[%s1 + $0x148] sm:$0xff]
    %v69 = vld [vmem:[%s1 + $0x150] sm:$0xff]
    %v70 = vld [vmem:[%s1 + $0x158] sm:$0xff]
    %v71 = vld [vmem:[%s1 + $0x160] sm:$0xff]
    %v72 = vld [vmem:[%s1 + $0x168] sm:$0xff]
    %v73 = vld [vmem:[%s1 + $0x170] sm:$0xff]
    %v74 = vld [vmem:[%s1 + $0x178] sm:$0xff]
    %v75 = vld [vmem:[%s1 + $0x180] sm:$0xff]
    %v76 = vld [vmem:[%s1 + $0x188] sm:$0xff]
    %v77 = vld [vmem:[%s1 + $0x190] sm:$0xff]
    %v78 = vld [vmem:[%s1 + $0x198] sm:$0xff]
    %v79 = vld [vmem:[%s1 + $0x1a0] sm:$0xff]
    %v80 = vld [vmem:[%s1 + $0x1a8] sm:$0xff]
    %v81 = vld [vmem:[%s1 + $0x1b0] sm:$0xff]
    %v82 = vld [vmem:[%s1 + $0x1b8] sm:$0xff]
    %v83 = vld [vmem:[%s1 + $0x1c0] sm:$0xff]
    %v84 = vld [vmem:[%s1 + $0x1c8] sm:$0xff]
    %v85 = vld [vmem:[%s1 + $0x1d0] sm:$0xff]
    %v86 = vld [vmem:[%s1 + $0x1d8] sm:$0xff]
    %v87 = vld [vmem:[%s1 + $0x1e0] sm:$0xff]
    %v88 = vld [vmem:[%s1 + $0x1e8] sm:$0xff]
    %v89 = vld [vmem:[%s1 + $0x1f0] sm:$0xff]
    %v90 = vld [vmem:[%s1 + $0x1f8] sm:$0xff]
    %v91 = vld [vmem:[%s1 + $0x200] sm:$0xff]
    %v92 = vld [vmem:[%s1 + $0x208] sm:$0xff]
    %v93 = vld [vmem:[%s1 + $0x210] sm:$0xff]
    %v94 = vld [vmem:[%s1 + $0x218] sm:$0xff]
    %v95 = vld [vmem:[%s1 + $0x220] sm:$0xff]
    %v96 = vld [vmem:[%s1 + $0x228] sm:$0xff]
    %v97 = vld [vmem:[%s1 + $0x230] sm:$0xff]
    %v98 = vld [vmem:[%s1 + $0x238] sm:$0xff]
    %v99 = vld [vmem:[%s1 + $0x240] sm:$0xff]
    %v100 = vld [vmem:[%s1 + $0x248] sm:$0xff]
    %v101 = vld [vmem:[%s1 + $0x250] sm:$0xff]
    %v102 = vld [vmem:[%s1 + $0x258] sm:$0xff]
    %v103 = vld [vmem:[%s1 + $0x260] sm:$0xff]
    %v104 = vld [vmem:[%s1 + $0x268] sm:$0xff]
    %v105 = vld [vmem:[%s1 + $0x270] sm:$0xff]
    %v106 = vld [vmem:[%s1 + $0x278] sm:$0xff]
    %v107 = vld [vmem:[%s1 + $0x280] sm:$0xff]
    %v108 = vld [vmem:[%s1 + $0x288] sm:$0xff]
    %v109 = vld [vmem:[%s1 + $0x290] sm:$0xff]
    %v110 = vld [vmem:[%s1 + $0x298] sm:$0xff]
    %v111 = vld [vmem:[%s1 + $0x2a0] sm:$0xff]
    %v112 = vld [vmem:[%s1 + $0x2a8] sm:$0xff]
    %v113 = vld [vmem:[%s1 + $0x2b0] sm:$0xff]
    %v114 = vld [vmem:[%s1 + $0x2b8] sm:$0xff]
    %v115 = vld [vmem:[%s1 + $0x2c0] sm:$0xff]
    %v116 = vld [vmem:[%s1 + $0x2c8] sm:$0xff]
    %v117 = vld [vmem:[%s1 + $0x2d0] sm:$0xff]
    %v118 = vld [vmem:[%s1 + $0x2d8] sm:$0xff]
    %v119 = vld [vmem:[%s1 + $0x2e0] sm:$0xff]
    %v120 = vld [vmem:[%s1 + $0x2e8] sm:$0xff]
    %v121 = vld [vmem:[%s1 + $0x2f0] sm:$0xff]
    %v122 = vld [vmem:[%s1 + $0x2f8] sm:$0xff]
    %v123 = vld [vmem:[%s1 + $0x300] sm:$0xff]
    %v124 = vld [vmem:[%s1 + $0x308] sm:$0xff]
    %v125 = vld [vmem:[%s1 + $0x310] sm:$0xff]
    %v126 = vld [vmem:[%s1 + $0x318] sm:$0xff]
    %v127 = vld [vmem:[%s1 + $0x320] sm:$0xff]
    %v128 = vld [vmem:[%s1 + $0x328] sm:$0xff]
    %v129 = vld [vmem:[%s1 + $0x330] sm:$0xff]
    %v130 = vld [vmem:[%s1 + $0x338] sm:$0xff]
    %v131 = vld [vmem:[%s1 + $0x340] sm:$0xff]
    %v132 = vld [vmem:[%s1 + $0x348] sm:$0xff]
    %v133 = vld [vmem:[%s1 + $0x350] sm:$0xff]
    %v134 = vld [vmem:[%s1 + $0x358] sm:$0xff]
    %v135 = vld [vmem:[%s1 + $0x360] sm:$0xff]
    %v136 = vld [vmem:[%s1 + $0x368] sm:$0xff]
    %v137 = vld [vmem:[%s1 + $0x370] sm:$0xff]
    %v138 = vld [vmem:[%s1 + $0x378] sm:$0xff]
    %v139 = vld [vmem:[%s1 + $0x380] sm:$0xff]
    %v140 = vld [vmem:[%s1 + $0x388] sm:$0xff]
    %v141 = vld [vmem:[%s1 + $0x390] sm:$0xff]
    %v142 = vld [vmem:[%s1 + $0x398] sm:$0xff]
    %v143 = vld [vmem:[%s1 + $0x3a0] sm:$0xff]
    %v144 = vld [vmem:[%s1 + $0x3a8] sm:$0xff]
    %v145 = vld [vmem:[%s1 + $0x3b0] sm:$0xff]
    %v146 = vld [vmem:[%s1 + $0x3b8] sm:$0xff]
    %v147 = vld [vmem:[%s1 + $0x3c0] sm:$0xff]
    %v148 = vld [vmem:[%s1 + $0x3c8] sm:$0xff]
    %v149 = vld [vmem:[%s1 + $0x3d0] sm:$0xff]
    %v150 = vld [vmem:[%s1 + $0x3d8] sm:$0xff]
    %v151 = vld [vmem:[%s1 + $0x3e0] sm:$0xff]
    %v152 = vld [vmem:[%s1 + $0x3e8] sm:$0xff]
    %v153 = vld [vmem:[%s1 + $0x3f0] sm:$0xff]
    %v154 = vld [vmem:[%s1 + $0x3f8] sm:$0xff]
    %v155 = vld [vmem:[%s1 + $0x400] sm:$0xff]
    %v156 = vld [vmem:[%s1 + $0x408] sm:$0xff]
    %v157 = vld [vmem:[%s1 + $0x410] sm:$0xff]
    %v158 = vld [vmem:[%s1 + $0x418] sm:$0xff]
    %v159 = vld [vmem:[%s1 + $0x420] sm:$0xff]
    %v160 = vld [vmem:[%s1 + $0x428] sm:$0xff]
    %v161 = vld [vmem:[%s1 + $0x430] sm:$0xff]
    %v162 = vld [vmem:[%s1 + $0x438] sm:$0xff]
    %v163 = vld [vmem:[%s1 + $0x440] sm:$0xff]
    %v164 = vld [vmem:[%s1 + $0x448] sm:$0xff]
    %v165 = vld [vmem:[%s1 + $0x450] sm:$0xff]
    %v166 = vld [vmem:[%s1 + $0x458] sm:$0xff]
    %v167 = vld [vmem:[%s1 + $0x460] sm:$0xff]
    %v168 = vld [vmem:[%s1 + $0x468] sm:$0xff]
    %v169 = vld [vmem:[%s1 + $0x470] sm:$0xff]
    %v170 = vld [vmem:[%s1 + $0x478] sm:$0xff]
    %v171 = vld [vmem:[%s1 + $0x480] sm:$0xff]
    %v172 = vld [vmem:[%s1 + $0x488] sm:$0xff]
    %v173 = vld [vmem:[%s1 + $0x490] sm:$0xff]
    %v174 = vld [vmem:[%s1 + $0x498] sm:$0xff]
    %v175 = vld [vmem:[%s1 + $0x4a0] sm:$0xff]
    %v176 = vld [vmem:[%s1 + $0x4a8] sm:$0xff]
    %v177 = vld [vmem:[%s1 + $0x4b0] sm:$0xff]
    %v178 = vld [vmem:[%s1 + $0x4b8] sm:$0xff]
    %v179 = vld [vmem:[%s1 + $0x4c0] sm:$0xff]
    %v180 = vld [vmem:[%s1 + $0x4c8] sm:$0xff]
    %v181 = vld [vmem:[%s1 + $0x4d0] sm:$0xff]
    %v182 = vld [vmem:[%s1 + $0x4d8] sm:$0xff]
    %v183 = vld [vmem:[%s1 + $0x4e0] sm:$0xff]
    %v184 = vld [vmem:[%s1 + $0x4e8] sm:$0xff]
    %v185 = vld [vmem:[%s1 + $0x4f0] sm:$0xff]
    %v186 = vld [vmem:[%s1 + $0x4f8] sm:$0xff]
    %v187 = vld [vmem:[%s1 + $0x500] sm:$0xff]
    %v188 = vld [vmem:[%s1 + $0x508] sm:$0xff]
    %v189 = vld [vmem:[%s1 + $0x510] sm:$0xff]
    %v190 = vld [vmem:[%s1 + $0x518] sm:$0xff]
    %v191 = vld [vmem:[%s1 + $0x520] sm:$0xff]
    %v192 = vld [vmem:[%s1 + $0x528] sm:$0xff]
    %v193 = vld [vmem:[%s1 + $0x530] sm:$0xff]
    %v194 = vld [vmem:[%s1 + $0x538] sm:$0xff]
    %v195 = vld [vmem:[%s1 + $0x540] sm:$0xff]
    %v196 = vld [vmem:[%s1 + $0x548] sm:$0xff]
    %v197 = vld [vmem:[%s1 + $0x550] sm:$0xff]
    %v198 = vld [vmem:[%s1 + $0x558] sm:$0xff]
    %v199 = vld [vmem:[%s1 + $0x560] sm:$0xff]
    %v200 = vld [vmem:[%s1 + $0x568] sm:$0xff]
    %v201 = vld [vmem:[%s1 + $0x570] sm:$0xff]
    %v202 = vld [vmem:[%s1 + $0x578] sm:$0xff]
    %v203 = vld [vmem:[%s1 + $0x580] sm:$0xff]
    %v204 = vld [vmem:[%s1 + $0x588] sm:$0xff]
    %v205 = vld [vmem:[%s1 + $0x590] sm:$0xff]
    %v206 = vld [vmem:[%s1 + $0x598] sm:$0xff]
    %v207 = vld [vmem:[%s1 + $0x5a0] sm:$0xff]
    %v208 = vld [vmem:[%s1 + $0x5a8] sm:$0xff]
    %v209 = vld [vmem:[%s1 + $0x5b0] sm:$0xff]
    %v210 = vld [vmem:[%s1 + $0x5b8] sm:$0xff]
    %v211 = vld [vmem:[%s1 + $0x5c0] sm:$0xff]
    %v212 = vld [vmem:[%s1 + $0x5c8] sm:$0xff]
    %v213 = vld [vmem:[%s1 + $0x5d0] sm:$0xff]
    %v214 = vld [vmem:[%s1 + $0x5d8] sm:$0xff]
    %v215 = vld [vmem:[%s1 + $0x5e0] sm:$0xff]
    %v216 = vld [vmem:[%s1 + $0x5e8] sm:$0xff]
    %v217 = vld [vmem:[%s1 + $0x5f0] sm:$0xff]
    %v218 = vld [vmem:[%s1 + $0x5f8] sm:$0xff]
    %v219 = vld [vmem:[%s1 + $0x600] sm:$0xff]
    %v220 = vld [vmem:[%s1 + $0x608] sm:$0xff]
    %v221 = vld [vmem:[%s1 + $0x610] sm:$0xff]
    %v222 = vld [vmem:[%s1 + $0x618] sm:$0xff]
    %v223 = vld [vmem:[%s1 + $0x620] sm:$0xff]
    %v224 = vld [vmem:[%s1 + $0x628] sm:$0xff]
    %v225 = vld [vmem:[%s1 + $0x630] sm:$0xff]
    %v226 = vld [vmem:[%s1 + $0x638] sm:$0xff]
    %v227 = vld [vmem:[%s1 + $0x640] sm:$0xff]
    %v228 = vld [vmem:[%s1 + $0x648] sm:$0xff]
    %v229 = vld [vmem:[%s1 + $0x650] sm:$0xff]
    %v230 = vld [vmem:[%s1 + $0x658] sm:$0xff]
    %v231 = vld [vmem:[%s1 + $0x660] sm:$0xff]
    %v232 = vld [vmem:[%s1 + $0x668] sm:$0xff]
    %v233 = vld [vmem:[%s1 + $0x670] sm:$0xff]
    %v234 = vld [vmem:[%s1 + $0x678] sm:$0xff]
    %v235 = vld [vmem:[%s1 + $0x680] sm:$0xff]
    %v236 = vld [vmem:[%s1 + $0x688] sm:$0xff]
    %v237 = vld [vmem:[%s1 + $0x690] sm:$0xff]
    %v238 = vld [vmem:[%s1 + $0x698] sm:$0xff]
    %v239 = vld [vmem:[%s1 + $0x6a0] sm:$0xff]
    %v240 = vld [vmem:[%s1 + $0x6a8] sm:$0xff]
    %v241 = vld [vmem:[%s1 + $0x6b0] sm:$0xff]
    %v242 = vld [vmem:[%s1 + $0x6b8] sm:$0xff]
    %v243 = vld [vmem:[%s1 + $0x6c0] sm:$0xff]
    %v244 = vld [vmem:[%s1 + $0x6c8] sm:$0xff]
    %v245 = vld [vmem:[%s1 + $0x6d0] sm:$0xff]
    %v246 = vld [vmem:[%s1 + $0x6d8] sm:$0xff]
    %v247 = vld [vmem:[%s1 + $0x6e0] sm:$0xff]
    %v248 = vld [vmem:[%s1 + $0x6e8] sm:$0xff]
    %v249 = vld [vmem:[%s1 + $0x6f0] sm:$0xff]
    %v250 = vld [vmem:[%s1 + $0x6f8] sm:$0xff]
    %v251 = vld [vmem:[%s1 + $0x700] sm:$0xff]
    %v252 = vld [vmem:[%s1 + $0x708] sm:$0xff]
    %v253 = vld [vmem:[%s1 + $0x710] sm:$0xff]
    %v254 = vld [vmem:[%s1 + $0x718] sm:$0xff]
    %v255 = vld [vmem:[%s1 + $0x720] sm:$0xff]
    %v256 = vld [vmem:[%s1 + $0x728] sm:$0xff]
    %v257 = vld [vmem:[%s1 + $0x730] sm:$0xff]
    %v258 = vld [vmem:[%s1 + $0x738] sm:$0xff]
    %v259 = vld [vmem:[%s1 + $0x740] sm:$0xff]
    %v260 = vld [vmem:[%s1 + $0x748] sm:$0xff]
    %v261 = vld [vmem:[%s1 + $0x750] sm:$0xff]
    %v262 = vld [vmem:[%s1 + $0x758] sm:$0xff]
    %v263 = vld [vmem:[%s1 + $0x760] sm:$0xff]
    %v264 = vld [vmem:[%s1 + $0x768] sm:$0xff]
    %v265 = vld [vmem:[%s1 + $0x770] sm:$0xff]
    %v266 = vld [vmem:[%s1 + $0x778] sm:$0xff]
    %v267 = vld [vmem:[%s1 + $0x780] sm:$0xff]
    %v268 = vld [vmem:[%s1 + $0x788] sm:$0xff]
    %v269 = vld [vmem:[%s1 + $0x790] sm:$0xff]
    %v270 = vld [vmem:[%s1 + $0x798] sm:$0xff]
    %v271 = vld [vmem:[%s1 + $0x7a0] sm:$0xff]
    %v272 = vld [vmem:[%s1 + $0x7a8] sm:$0xff]
    %v273 = vld [vmem:[%s1 + $0x7b0] sm:$0xff]
    %v274 = vld [vmem:[%s1 + $0x7b8] sm:$0xff]
    %v275 = vld [vmem:[%s1 + $0x7c0] sm:$0xff]
    %v276 = vld [vmem:[%s1 + $0x7c8] sm:$0xff]
    %v277 = vld [vmem:[%s1 + $0x7d0] sm:$0xff]
    %v278 = vld [vmem:[%s1 + $0x7d8] sm:$0xff]
    %v279 = vld [vmem:[%s1 + $0x7e0] sm:$0xff]
    %v280 = vld [vmem:[%s1 + $0x7e8] sm:$0xff]
    %v281 = vld [vmem:[%s1 + $0x7f0] sm:$0xff]
    %v282 = vld [vmem:[%s1 + $0x7f8] sm:$0xff]
    %v283 = vld [vmem:[%s1 + $0x800] sm:$0xff]
    %v284 = vld [vmem:[%s1 + $0x808] sm:$0xff]
    %v285 = vld [vmem:[%s1 + $0x810] sm:$0xff]
    %v286 = vld [vmem:[%s1 + $0x818] sm:$0xff]
    %v287 = vld [vmem:[%s1 + $0x820] sm:$0xff]
    %v288 = vld [vmem:[%s1 + $0x828] sm:$0xff]
    %v289 = vld [vmem:[%s1 + $0x830] sm:$0xff]
    %v290 = vld [vmem:[%s1 + $0x838] sm:$0xff]
    %v291 = vld [vmem:[%s1 + $0x840] sm:$0xff]
    %v292 = vld [vmem:[%s1 + $0x848] sm:$0xff]
    %v293 = vld [vmem:[%s1 + $0x850] sm:$0xff]
    %v294 = vld [vmem:[%s1 + $0x858] sm:$0xff]
    %v295 = vld [vmem:[%s1 + $0x860] sm:$0xff]
    %v296 = vld [vmem:[%s1 + $0x868] sm:$0xff]
    %v297 = vld [vmem:[%s1 + $0x870] sm:$0xff]
    %v298 = vld [vmem:[%s1 + $0x878] sm:$0xff]
    %v299 = vld [vmem:[%s1 + $0x880] sm:$0xff]
    %v300 = vld [vmem:[%s1 + $0x888] sm:$0xff]
    %v301 = vld [vmem:[%s1 + $0x890] sm:$0xff]
    %v302 = vld [vmem:[%s1 + $0x898] sm:$0xff]
    %v303 = vld [vmem:[%s1 + $0x8a0] sm:$0xff]
    %v304 = vld [vmem:[%s1 + $0x8a8] sm:$0xff]
    %v305 = vld [vmem:[%s1 + $0x8b0] sm:$0xff]
    %v306 = vld [vmem:[%s1 + $0x8b8] sm:$0xff]
    %v307 = vld [vmem:[%s1 + $0x8c0] sm:$0xff]
    %v308 = vld [vmem:[%s1 + $0x8c8] sm:$0xff]
    %v309 = vld [vmem:[%s1 + $0x8d0] sm:$0xff]
    %v310 = vld [vmem:[%s1 + $0x8d8] sm:$0xff]
    %v311 = vld [vmem:[%s1 + $0x8e0] sm:$0xff]
    %v312 = vld [vmem:[%s1 + $0x8e8] sm:$0xff]
    %v313 = vld [vmem:[%s1 + $0x8f0] sm:$0xff]
    %v314 = vld [vmem:[%s1 + $0x8f8] sm:$0xff]
    %v315 = vld [vmem:[%s1 + $0x900] sm:$0xff]
    %v316 = vld [vmem:[%s1 + $0x908] sm:$0xff]
    %v317 = vld [vmem:[%s1 + $0x910] sm:$0xff]
    %v318 = vld [vmem:[%s1 + $0x918] sm:$0xff]
    %v319 = vld [vmem:[%s1 + $0x920] sm:$0xff]
    %v320 = vld [vmem:[%s1 + $0x928] sm:$0xff]
    %v321 = vld [vmem:[%s1 + $0x930] sm:$0xff]
    %v322 = vld [vmem:[%s1 + $0x938] sm:$0xff]
    %v323 = vld [vmem:[%s1 + $0x940] sm:$0xff]
    %v324 = vld [vmem:[%s1 + $0x948] sm:$0xff]
    %v325 = vld [vmem:[%s1 + $0x950] sm:$0xff]
    %v326 = vld [vmem:[%s1 + $0x958] sm:$0xff]
    %v327 = vld [vmem:[%s1 + $0x960] sm:$0xff]
    %v328 = vld [vmem:[%s1 + $0x968] sm:$0xff]
    %v329 = vld [vmem:[%s1 + $0x970] sm:$0xff]
    %v330 = vld [vmem:[%s1 + $0x978] sm:$0xff]
    %v331 = vld [vmem:[%s1 + $0x980] sm:$0xff]
    %v332 = vld [vmem:[%s1 + $0x988] sm:$0xff]
    %v333 = vld [vmem:[%s1 + $0x990] sm:$0xff]
    %v334 = vld [vmem:[%s1 + $0x998] sm:$0xff]
    %v335 = vld [vmem:[%s1 + $0x9a0] sm:$0xff]
    %v336 = vld [vmem:[%s1 + $0x9a8] sm:$0xff]
    %v337 = vld [vmem:[%s1 + $0x9b0] sm:$0xff]
    %v338 = vld [vmem:[%s1 + $0x9b8] sm:$0xff]
    %v339 = vld [vmem:[%s1 + $0x9c0] sm:$0xff]
    %v340 = vld [vmem:[%s1 + $0x9c8] sm:$0xff]
    %v341 = vld [vmem:[%s1 + $0x9d0] sm:$0xff]
    %v342 = vld [vmem:[%s1 + $0x9d8] sm:$0xff]
    %v343 = vld [vmem:[%s1 + $0x9e0] sm:$0xff]
    %v344 = vld [vmem:[%s1 + $0x9e8] sm:$0xff]
    %v345 = vld [vmem:[%s1 + $0x9f0] sm:$0xff]
    %v346 = vld [vmem:[%s1 + $0x9f8] sm:$0xff]
    %v347 = vld [vmem:[%s1 + $0xa00] sm:$0xff]
    %v348 = vld [vmem:[%s1 + $0xa08] sm:$0xff]
    %v349 = vld [vmem:[%s1 + $0xa10] sm:$0xff]
    %v350 = vld [vmem:[%s1 + $0xa18] sm:$0xff]
    %v351 = vld [vmem:[%s1 + $0xa20] sm:$0xff]
    %v352 = vld [vmem:[%s1 + $0xa28] sm:$0xff]
    %v353 = vld [vmem:[%s1 + $0xa30] sm:$0xff]
    %v354 = vld [vmem:[%s1 + $0xa38] sm:$0xff]
    %v355 = vld [vmem:[%s1 + $0xa40] sm:$0xff]
    %v356 = vld [vmem:[%s1 + $0xa48] sm:$0xff]
    %v357 = vld [vmem:[%s1 + $0xa50] sm:$0xff]
    %v358 = vld [vmem:[%s1 + $0xa58] sm:$0xff]
    %v359 = vld [vmem:[%s1 + $0xa60] sm:$0xff]
    %v360 = vld [vmem:[%s1 + $0xa68] sm:$0xff]
    %v361 = vld [vmem:[%s1 + $0xa70] sm:$0xff]
    %v362 = vld [vmem:[%s1 + $0xa78] sm:$0xff]
    %v363 = vld [vmem:[%s1 + $0xa80] sm:$0xff]
    %v364 = vld [vmem:[%s1 + $0xa88] sm:$0xff]
    %v365 = vld [vmem:[%s1 + $0xa90] sm:$0xff]
    %v366 = vld [vmem:[%s1 + $0xa98] sm:$0xff]
    %v367 = vld [vmem:[%s1 + $0xaa0] sm:$0xff]
    %v368 = vld [vmem:[%s1 + $0xaa8] sm:$0xff]
    %v369 = vld [vmem:[%s1 + $0xab0] sm:$0xff]
    %v370 = vld [vmem:[%s1 + $0xab8] sm:$0xff]
    %v371 = vld [vmem:[%s1 + $0xac0] sm:$0xff]
    %v372 = vld [vmem:[%s1 + $0xac8] sm:$0xff]
    %v373 = vld [vmem:[%s1 + $0xad0] sm:$0xff]
    %v374 = vld [vmem:[%s1 + $0xad8] sm:$0xff]
    %v375 = vld [vmem:[%s1 + $0xae0] sm:$0xff]
    %v376 = vld [vmem:[%s1 + $0xae8] sm:$0xff]
    %v377 = vld [vmem:[%s1 + $0xaf0] sm:$0xff]
    %v378 = vld [vmem:[%s1 + $0xaf8] sm:$0xff]
    %v379 = vld [vmem:[%s1 + $0xb00] sm:$0xff]
    %v380 = vld [vmem:[%s1 + $0xb08] sm:$0xff]
    %v381 = vld [vmem:[%s1 + $0xb10] sm:$0xff]
    %v382 = vld [vmem:[%s1 + $0xb18] sm:$0xff]
    %v383 = vld [vmem:[%s1 + $0xb20] sm:$0xff]
    %v384 = vld [vmem:[%s1 + $0xb28] sm:$0xff]
    %v385 = vld [vmem:[%s1 + $0xb30] sm:$0xff]
    %v386 = vld [vmem:[%s1 + $0xb38] sm:$0xff]
    %v387 = vld [vmem:[%s1 + $0xb40] sm:$0xff]
    %v388 = vld [vmem:[%s1 + $0xb48] sm:$0xff]
    %v389 = vld [vmem:[%s1 + $0xb50] sm:$0xff]
    %v390 = vld [vmem:[%s1 + $0xb58] sm:$0xff]
    %v391 = vld [vmem:[%s1 + $0xb60] sm:$0xff]
    %v392 = vld [vmem:[%s1 + $0xb68] sm:$0xff]
    %v393 = vld [vmem:[%s1 + $0xb70] sm:$0xff]
    %v394 = vld [vmem:[%s1 + $0xb78] sm:$0xff]
    %v395 = vld [vmem:[%s1 + $0xb80] sm:$0xff]
    %v396 = vld [vmem:[%s1 + $0xb88] sm:$0xff]
    %v397 = vld [vmem:[%s1 + $0xb90] sm:$0xff]
    %v398 = vld [vmem:[%s1 + $0xb98] sm:$0xff]
    %v399 = vld [vmem:[%s1 + $0xba0] sm:$0xff]
    %v400 = vld [vmem:[%s1 + $0xba8] sm:$0xff]
    %v401 = vld [vmem:[%s1 + $0xbb0] sm:$0xff]
    %v402 = vld [vmem:[%s1 + $0xbb8] sm:$0xff]
    %v403 = vld [vmem:[%s1 + $0xbc0] sm:$0xff]
    %v404 = vld [vmem:[%s1 + $0xbc8] sm:$0xff]
    %v405 = vld [vmem:[%s1 + $0xbd0] sm:$0xff]
    %v406 = vld [vmem:[%s1 + $0xbd8] sm:$0xff]
    %v407 = vld [vmem:[%s1 + $0xbe0] sm:$0xff]
    %v408 = vld [vmem:[%s1 + $0xbe8] sm:$0xff]
    %v409 = vld [vmem:[%s1 + $0xbf0] sm:$0xff]
    %v410 = vld [vmem:[%s1 + $0xbf8] sm:$0xff]
    %v411 = vld [vmem:[%s1 + $0xc00] sm:$0xff]
    %v412 = vld [vmem:[%s1 + $0xc08] sm:$0xff]
    %v413 = vld [vmem:[%s1 + $0xc10] sm:$0xff]
    %v414 = vld [vmem:[%s1 + $0xc18] sm:$0xff]
    %v415 = vld [vmem:[%s1 + $0xc20] sm:$0xff]
    %v416 = vld [vmem:[%s1 + $0xc28] sm:$0xff]
    %v417 = vld [vmem:[%s1 + $0xc30] sm:$0xff]
    %v418 = vld [vmem:[%s1 + $0xc38] sm:$0xff]
    %v419 = vld [vmem:[%s1 + $0xc40] sm:$0xff]
    %v420 = vld [vmem:[%s1 + $0xc48] sm:$0xff]
    %v421 = vld [vmem:[%s1 + $0xc50] sm:$0xff]
    %v422 = vld [vmem:[%s1 + $0xc58] sm:$0xff]
    %v423 = vld [vmem:[%s1 + $0xc60] sm:$0xff]
    %v424 = vld [vmem:[%s1 + $0xc68] sm:$0xff]
    %v425 = vld [vmem:[%s1 + $0xc70] sm:$0xff]
    %v426 = vld [vmem:[%s1 + $0xc78] sm:$0xff]
    %v427 = vld [vmem:[%s1 + $0xc80] sm:$0xff]
    %v428 = vld [vmem:[%s1 + $0xc88] sm:$0xff]
    %v429 = vld [vmem:[%s1 + $0xc90] sm:$0xff]
    %v430 = vld [vmem:[%s1 + $0xc98] sm:$0xff]
    %v431 = vld [vmem:[%s1 + $0xca0] sm:$0xff]
    %v432 = vld [vmem:[%s1 + $0xca8] sm:$0xff]
    %v433 = vld [vmem:[%s1 + $0xcb0] sm:$0xff]
    %v434 = vld [vmem:[%s1 + $0xcb8] sm:$0xff]
    %v435 = vld [vmem:[%s1 + $0xcc0] sm:$0xff]
    %v436 = vld [vmem:[%s1 + $0xcc8] sm:$0xff]
    %v437 = vld [vmem:[%s1 + $0xcd0] sm:$0xff]
    %v438 = vld [vmem:[%s1 + $0xcd8] sm:$0xff]
    %v439 = vld [vmem:[%s1 + $0xce0] sm:$0xff]
    %v440 = vld [vmem:[%s1 + $0xce8] sm:$0xff]
    %v441 = vld [vmem:[%s1 + $0xcf0] sm:$0xff]
    %v442 = vld [vmem:[%s1 + $0xcf8] sm:$0xff]
    %v443 = vld [vmem:[%s1 + $0xd00] sm:$0xff]
    %v444 = vld [vmem:[%s1 + $0xd08] sm:$0xff]
    %v445 = vld [vmem:[%s1 + $0xd10] sm:$0xff]
    %v446 = vld [vmem:[%s1 + $0xd18] sm:$0xff]
    %v447 = vld [vmem:[%s1 + $0xd20] sm:$0xff]
    %v448 = vld [vmem:[%s1 + $0xd28] sm:$0xff]
    %v449 = vld [vmem:[%s1 + $0xd30] sm:$0xff]
    %v450 = vld [vmem:[%s1 + $0xd38] sm:$0xff]
    %v451 = vld [vmem:[%s1 + $0xd40] sm:$0xff]
    %v452 = vld [vmem:[%s1 + $0xd48] sm:$0xff]
    %v453 = vld [vmem:[%s1 + $0xd50] sm:$0xff]
    %v454 = vld [vmem:[%s1 + $0xd58] sm:$0xff]
    %v455 = vld [vmem:[%s1 + $0xd60] sm:$0xff]
    %v456 = vld [vmem:[%s1 + $0xd68] sm:$0xff]
    %v457 = vld [vmem:[%s1 + $0xd70] sm:$0xff]
    %v458 = vld [vmem:[%s1 + $0xd78] sm:$0xff]
    %v459 = vld [vmem:[%s1 + $0xd80] sm:$0xff]
    %v460 = vld [vmem:[%s1 + $0xd88] sm:$0xff]
    %v461 = vld [vmem:[%s1 + $0xd90] sm:$0xff]
    %v462 = vld [vmem:[%s1 + $0xd98] sm:$0xff]
    %v463 = vld [vmem:[%s1 + $0xda0] sm:$0xff]
    %v464 = vld [vmem:[%s1 + $0xda8] sm:$0xff]
    %v465 = vld [vmem:[%s1 + $0xdb0] sm:$0xff]
    %v466 = vld [vmem:[%s1 + $0xdb8] sm:$0xff]
    %v467 = vld [vmem:[%s1 + $0xdc0] sm:$0xff]
    %v468 = vld [vmem:[%s1 + $0xdc8] sm:$0xff]
    %v469 = vld [vmem:[%s1 + $0xdd0] sm:$0xff]
    %v470 = vld [vmem:[%s1 + $0xdd8] sm:$0xff]
    %v471 = vld [vmem:[%s1 + $0xde0] sm:$0xff]
    %v472 = vld [vmem:[%s1 + $0xde8] sm:$0xff]
    %v473 = vld [vmem:[%s1 + $0xdf0] sm:$0xff]
    %v474 = vld [vmem:[%s1 + $0xdf8] sm:$0xff]
    %v475 = vld [vmem:[%s1 + $0xe00] sm:$0xff]
    %v476 = vld [vmem:[%s1 + $0xe08] sm:$0xff]
    %v477 = vld [vmem:[%s1 + $0xe10] sm:$0xff]
    %v478 = vld [vmem:[%s1 + $0xe18] sm:$0xff]
    %v479 = vld [vmem:[%s1 + $0xe20] sm:$0xff]
    %v480 = vld [vmem:[%s1 + $0xe28] sm:$0xff]
    %v481 = vld [vmem:[%s1 + $0xe30] sm:$0xff]
    %v482 = vld [vmem:[%s1 + $0xe38] sm:$0xff]
    %v483 = vld [vmem:[%s1 + $0xe40] sm:$0xff]
    %v484 = vld [vmem:[%s1 + $0xe48] sm:$0xff]
    %v485 = vld [vmem:[%s1 + $0xe50] sm:$0xff]
    %v486 = vld [vmem:[%s1 + $0xe58] sm:$0xff]
    %v487 = vld [vmem:[%s1 + $0xe60] sm:$0xff]
    %v488 = vld [vmem:[%s1 + $0xe68] sm:$0xff]
    %v489 = vld [vmem:[%s1 + $0xe70] sm:$0xff]
    %v490 = vld [vmem:[%s1 + $0xe78] sm:$0xff]
    %v491 = vld [vmem:[%s1 + $0xe80] sm:$0xff]
    %v492 = vld [vmem:[%s1 + $0xe88] sm:$0xff]
    %v493 = vld [vmem:[%s1 + $0xe90] sm:$0xff]
    %v494 = vld [vmem:[%s1 + $0xe98] sm:$0xff]
    %v495 = vld [vmem:[%s1 + $0xea0] sm:$0xff]
    %v496 = vld [vmem:[%s1 + $0xea8] sm:$0xff]
    %v497 = vld [vmem:[%s1 + $0xeb0] sm:$0xff]
    %v498 = vld [vmem:[%s1 + $0xeb8] sm:$0xff]
    %v499 = vld [vmem:[%s1 + $0xec0] sm:$0xff]
    %v500 = vld [vmem:[%s1 + $0xec8] sm:$0xff]
    %v501 = vld [vmem:[%s1 + $0xed0] sm:$0xff]
    %v502 = vld [vmem:[%s1 + $0xed8] sm:$0xff]
    %v503 = vld [vmem:[%s1 + $0xee0] sm:$0xff]
    %v504 = vld [vmem:[%s1 + $0xee8] sm:$0xff]
    %v505 = vld [vmem:[%s1 + $0xef0] sm:$0xff]
    %v506 = vld [vmem:[%s1 + $0xef8] sm:$0xff]
    %v507 = vld [vmem:[%s1 + $0xf00] sm:$0xff]
    %v508 = vld [vmem:[%s1 + $0xf08] sm:$0xff]
    %v509 = vld [vmem:[%s1 + $0xf10] sm:$0xff]
    %v510 = vld [vmem:[%s1 + $0xf18] sm:$0xff]
    %v511 = vld [vmem:[%s1 + $0xf20] sm:$0xff]
    %v512 = vld [vmem:[%s1 + $0xf28] sm:$0xff]
    %v513 = vld [vmem:[%s1 + $0xf30] sm:$0xff]
    %v514 = vld [vmem:[%s1 + $0xf38] sm:$0xff]
    %v515 = vld [vmem:[%s1 + $0xf40] sm:$0xff]
    %v516 = vld [vmem:[%s1 + $0xf48] sm:$0xff]
    %v517 = vld [vmem:[%s1 + $0xf50] sm:$0xff]
    %v518 = vld [vmem:[%s1 + $0xf58] sm:$0xff]
    %v519 = vld [vmem:[%s1 + $0xf60] sm:$0xff]
    %v520 = vld [vmem:[%s1 + $0xf68] sm:$0xff]
    %v521 = vld [vmem:[%s1 + $0xf70] sm:$0xff]
    %v522 = vld [vmem:[%s1 + $0xf78] sm:$0xff]
    %v523 = vld [vmem:[%s1 + $0xf80] sm:$0xff]
    %v524 = vld [vmem:[%s1 + $0xf88] sm:$0xff]
    %v525 = vld [vmem:[%s1 + $0xf90] sm:$0xff]
    %v526 = vld [vmem:[%s1 + $0xf98] sm:$0xff]
    %v527 = vld [vmem:[%s1 + $0xfa0] sm:$0xff]
    %v528 = vld [vmem:[%s1 + $0xfa8] sm:$0xff]
    %v529 = vld [vmem:[%s1 + $0xfb0] sm:$0xff]
    %v530 = vld [vmem:[%s1 + $0xfb8] sm:$0xff]
    %v531 = vld [vmem:[%s1 + $0xfc0] sm:$0xff]
    %v532 = vld [vmem:[%s1 + $0xfc8] sm:$0xff]
    %v533 = vld [vmem:[%s1 + $0xfd0] sm:$0xff]
    %v534 = vld [vmem:[%s1 + $0xfd8] sm:$0xff]
    %v535 = vld [vmem:[%s1 + $0xfe0] sm:$0xff]
    %v536 = vld [vmem:[%s1 + $0xfe8] sm:$0xff]
    %v537 = vld [vmem:[%s1 + $0xff0] sm:$0xff]
    %v538 = vld [vmem:[%s1 + $0xff8] sm:$0xff]
    %v539 = vld [vmem:[%s1 + $0x1000] sm:$0xff]
    %v540 = vld [vmem:[%s1 + $0x1008] sm:$0xff]
    %v541 = vld [vmem:[%s1 + $0x1010] sm:$0xff]
    %v542 = vld [vmem:[%s1 + $0x1018] sm:$0xff]
    %v543 = vld [vmem:[%s1 + $0x1020] sm:$0xff]
    %v544 = vld [vmem:[%s1 + $0x1028] sm:$0xff]
    %v545 = vld [vmem:[%s1 + $0x1030] sm:$0xff]
    %v546 = vld [vmem:[%s1 + $0x1038] sm:$0xff]
    %v547 = vld [vmem:[%s1 + $0x1040] sm:$0xff]
    %v548 = vld [vmem:[%s1 + $0x1048] sm:$0xff]
    %v549 = vld [vmem:[%s1 + $0x1050] sm:$0xff]
    %v550 = vld [vmem:[%s1 + $0x1058] sm:$0xff]
    %v551 = vld [vmem:[%s1 + $0x1060] sm:$0xff]
    %v552 = vld [vmem:[%s1 + $0x1068] sm:$0xff]
    %v553 = vld [vmem:[%s1 + $0x1070] sm:$0xff]
    %v554 = vld [vmem:[%s1 + $0x1078] sm:$0xff]
    %v555 = vld [vmem:[%s1 + $0x1080] sm:$0xff]
    %v556 = vld [vmem:[%s1 + $0x1088] sm:$0xff]
    %v557 = vld [vmem:[%s1 + $0x1090] sm:$0xff]
    %v558 = vld [vmem:[%s1 + $0x1098] sm:$0xff]
    %v559 = vld [vmem:[%s1 + $0x10a0] sm:$0xff]
    %v560 = vld [vmem:[%s1 + $0x10a8] sm:$0xff]
    %v561 = vld [vmem:[%s1 + $0x10b0] sm:$0xff]
    %v562 = vld [vmem:[%s1 + $0x10b8] sm:$0xff]
    %v563 = vld [vmem:[%s1 + $0x10c0] sm:$0xff]
    %v564 = vld [vmem:[%s1 + $0x10c8] sm:$0xff]
    %v565 = vld [vmem:[%s1 + $0x10d0] sm:$0xff]
    %v566 = vld [vmem:[%s1 + $0x10d8] sm:$0xff]
    %v567 = vld [vmem:[%s1 + $0x10e0] sm:$0xff]
    %v568 = vld [vmem:[%s1 + $0x10e8] sm:$0xff]
    %v569 = vld [vmem:[%s1 + $0x10f0] sm:$0xff]
    %v570 = vld [vmem:[%s1 + $0x10f8] sm:$0xff]
    %v571 = vld [vmem:[%s1 + $0x1100] sm:$0xff]
    %v572 = vld [vmem:[%s1 + $0x1108] sm:$0xff]
    %v573 = vld [vmem:[%s1 + $0x1110] sm:$0xff]
    %v574 = vld [vmem:[%s1 + $0x1118] sm:$0xff]
    %v575 = vld [vmem:[%s1 + $0x1120] sm:$0xff]
    %v576 = vld [vmem:[%s1 + $0x1128] sm:$0xff]
    %v577 = vld [vmem:[%s1 + $0x1130] sm:$0xff]
    %v578 = vld [vmem:[%s1 + $0x1138] sm:$0xff]
    %v579 = vld [vmem:[%s1 + $0x1140] sm:$0xff]
    %v580 = vld [vmem:[%s1 + $0x1148] sm:$0xff]
    %v581 = vld [vmem:[%s1 + $0x1150] sm:$0xff]
    %v582 = vld [vmem:[%s1 + $0x1158] sm:$0xff]
    %v583 = vld [vmem:[%s1 + $0x1160] sm:$0xff]
    %v584 = vld [vmem:[%s1 + $0x1168] sm:$0xff]
    %v585 = vld [vmem:[%s1 + $0x1170] sm:$0xff]
    %v586 = vld [vmem:[%s1 + $0x1178] sm:$0xff]
    %v587 = vld [vmem:[%s1 + $0x1180] sm:$0xff]
    %v588 = vld [vmem:[%s1 + $0x1188] sm:$0xff]
    %v589 = vld [vmem:[%s1 + $0x1190] sm:$0xff]
    %v590 = vld [vmem:[%s1 + $0x1198] sm:$0xff]
    %v591 = vld [vmem:[%s1 + $0x11a0] sm:$0xff]
    %v592 = vld [vmem:[%s1 + $0x11a8] sm:$0xff]
    %v593 = vld [vmem:[%s1 + $0x11b0] sm:$0xff]
    %v594 = vld [vmem:[%s1 + $0x11b8] sm:$0xff]
    %v595 = vld [vmem:[%s1 + $0x11c0] sm:$0xff]
    %v596 = vld [vmem:[%s1 + $0x11c8] sm:$0xff]
    %v597 = vld [vmem:[%s1 + $0x11d0] sm:$0xff]
    %v598 = vld [vmem:[%s1 + $0x11d8] sm:$0xff]
    %v599 = vld [vmem:[%s1 + $0x11e0] sm:$0xff]
    %v600 = vld [vmem:[%s1 + $0x11e8] sm:$0xff]
    %v601 = vld [vmem:[%s1 + $0x11f0] sm:$0xff]
    %v602 = vld [vmem:[%s1 + $0x11f8] sm:$0xff]
    %v603 = vld [vmem:[%s1 + $0x1200] sm:$0xff]
    %v604 = vld [vmem:[%s1 + $0x1208] sm:$0xff]
    %v605 = vld [vmem:[%s1 + $0x1210] sm:$0xff]
    %v606 = vld [vmem:[%s1 + $0x1218] sm:$0xff]
    %v607 = vld [vmem:[%s1 + $0x1220] sm:$0xff]
    %v608 = vld [vmem:[%s1 + $0x1228] sm:$0xff]
    %v609 = vld [vmem:[%s1 + $0x1230] sm:$0xff]
    %v610 = vld [vmem:[%s1 + $0x1238] sm:$0xff]
    %v611 = vld [vmem:[%s1 + $0x1240] sm:$0xff]
    %v612 = vld [vmem:[%s1 + $0x1248] sm:$0xff]
    %v613 = vld [vmem:[%s1 + $0x1250] sm:$0xff]
    %v614 = vld [vmem:[%s1 + $0x1258] sm:$0xff]
    %v615 = vld [vmem:[%s1 + $0x1260] sm:$0xff]
    %v616 = vld [vmem:[%s1 + $0x1268] sm:$0xff]
    %v617 = vld [vmem:[%s1 + $0x1270] sm:$0xff]
    %v618 = vld [vmem:[%s1 + $0x1278] sm:$0xff]
    %v619 = vld [vmem:[%s1 + $0x1280] sm:$0xff]
    %v620 = vld [vmem:[%s1 + $0x1288] sm:$0xff]
    %v621 = vld [vmem:[%s1 + $0x1290] sm:$0xff]
    %v622 = vld [vmem:[%s1 + $0x1298] sm:$0xff]
    %v623 = vld [vmem:[%s1 + $0x12a0] sm:$0xff]
    %v624 = vld [vmem:[%s1 + $0x12a8] sm:$0xff]
    %v625 = vld [vmem:[%s1 + $0x12b0] sm:$0xff]
    %v626 = vld [vmem:[%s1 + $0x12b8] sm:$0xff]
    %v627 = vld [vmem:[%s1 + $0x12c0] sm:$0xff]
    %v628 = vld [vmem:[%s1 + $0x12c8] sm:$0xff]
    %v629 = vld [vmem:[%s1 + $0x12d0] sm:$0xff]
    %v630 = vld [vmem:[%s1 + $0x12d8] sm:$0xff]
    %v631 = vld [vmem:[%s1 + $0x12e0] sm:$0xff]
    %v632 = vld [vmem:[%s1 + $0x12e8] sm:$0xff]
    %v633 = vld [vmem:[%s1 + $0x12f0] sm:$0xff]
    %v634 = vld [vmem:[%s1 + $0x12f8] sm:$0xff]
    %v635 = vld [vmem:[%s1 + $0x1300] sm:$0xff]
    %v636 = vld [vmem:[%s1 + $0x1308] sm:$0xff]
    %v637 = vld [vmem:[%s1 + $0x1310] sm:$0xff]
    %v638 = vld [vmem:[%s1 + $0x1318] sm:$0xff]
    %v639 = vld [vmem:[%s1 + $0x1320] sm:$0xff]
    %v640 = vld [vmem:[%s1 + $0x1328] sm:$0xff]
    %v641 = vld [vmem:[%s1 + $0x1330] sm:$0xff]
    %v642 = vld [vmem:[%s1 + $0x1338] sm:$0xff]
    %v643 = vld [vmem:[%s1 + $0x1340] sm:$0xff]
    %v644 = vld [vmem:[%s1 + $0x1348] sm:$0xff]
    %v645 = vld [vmem:[%s1 + $0x1350] sm:$0xff]
    %v646 = vld [vmem:[%s1 + $0x1358] sm:$0xff]
    %v647 = vld [vmem:[%s1 + $0x1360] sm:$0xff]
    %v648 = vld [vmem:[%s1 + $0x1368] sm:$0xff]
    %v649 = vld [vmem:[%s1 + $0x1370] sm:$0xff]
    %v650 = vld [vmem:[%s1 + $0x1378] sm:$0xff]
    %v651 = vld [vmem:[%s1 + $0x1380] sm:$0xff]
    %v652 = vld [vmem:[%s1 + $0x1388] sm:$0xff]
    %v653 = vld [vmem:[%s1 + $0x1390] sm:$0xff]
    %v654 = vld [vmem:[%s1 + $0x1398] sm:$0xff]
    %v655 = vld [vmem:[%s1 + $0x13a0] sm:$0xff]
    %v656 = vld [vmem:[%s1 + $0x13a8] sm:$0xff]
    %v657 = vld [vmem:[%s1 + $0x13b0] sm:$0xff]
    %v658 = vld [vmem:[%s1 + $0x13b8] sm:$0xff]
    %v659 = vld [vmem:[%s1 + $0x13c0] sm:$0xff]
    %v660 = vld [vmem:[%s1 + $0x13c8] sm:$0xff]
    %v661 = vld [vmem:[%s1 + $0x13d0] sm:$0xff]
    %v662 = vld [vmem:[%s1 + $0x13d8] sm:$0xff]
    %v663 = vld [vmem:[%s1 + $0x13e0] sm:$0xff]
    %v664 = vld [vmem:[%s1 + $0x13e8] sm:$0xff]
    %v665 = vld [vmem:[%s1 + $0x13f0] sm:$0xff]
    %v666 = vld [vmem:[%s1 + $0x13f8] sm:$0xff]
    %v667 = vld [vmem:[%s1 + $0x1400] sm:$0xff]
    %v668 = vld [vmem:[%s1 + $0x1408] sm:$0xff]
    %v669 = vld [vmem:[%s1 + $0x1410] sm:$0xff]
    %v670 = vld [vmem:[%s1 + $0x1418] sm:$0xff]
    %v671 = vld [vmem:[%s1 + $0x1420] sm:$0xff]
    %v672 = vld [vmem:[%s1 + $0x1428] sm:$0xff]
    %v673 = vld [vmem:[%s1 + $0x1430] sm:$0xff]
    %v674 = vld [vmem:[%s1 + $0x1438] sm:$0xff]
    %v675 = vld [vmem:[%s1 + $0x1440] sm:$0xff]
    %v676 = vld [vmem:[%s1 + $0x1448] sm:$0xff]
    %v677 = vld [vmem:[%s1 + $0x1450] sm:$0xff]
    %v678 = vld [vmem:[%s1 + $0x1458] sm:$0xff]
    %v679 = vld [vmem:[%s1 + $0x1460] sm:$0xff]
    %v680 = vld [vmem:[%s1 + $0x1468] sm:$0xff]
    %v681 = vld [vmem:[%s1 + $0x1470] sm:$0xff]
    %v682 = vld [vmem:[%s1 + $0x1478] sm:$0xff]
    %v683 = vld [vmem:[%s1 + $0x1480] sm:$0xff]
    %v684 = vld [vmem:[%s1 + $0x1488] sm:$0xff]
    %v685 = vld [vmem:[%s1 + $0x1490] sm:$0xff]
    %v686 = vld [vmem:[%s1 + $0x1498] sm:$0xff]
    %v687 = vld [vmem:[%s1 + $0x14a0] sm:$0xff]
    %v688 = vld [vmem:[%s1 + $0x14a8] sm:$0xff]
    %v689 = vld [vmem:[%s1 + $0x14b0] sm:$0xff]
    %v690 = vld [vmem:[%s1 + $0x14b8] sm:$0xff]
    %v691 = vld [vmem:[%s1 + $0x14c0] sm:$0xff]
    %v692 = vld [vmem:[%s1 + $0x14c8] sm:$0xff]
    %v693 = vld [vmem:[%s1 + $0x14d0] sm:$0xff]
    %v694 = vld [vmem:[%s1 + $0x14d8] sm:$0xff]
    %v695 = vld [vmem:[%s1 + $0x14e0] sm:$0xff]
    %v696 = vld [vmem:[%s1 + $0x14e8] sm:$0xff]
    %v697 = vld [vmem:[%s1 + $0x14f0] sm:$0xff]
    %v698 = vld [vmem:[%s1 + $0x14f8] sm:$0xff]
    %v699 = vld [vmem:[%s1 + $0x1500] sm:$0xff]
    %v700 = vld [vmem:[%s1 + $0x1508] sm:$0xff]
    %v701 = vld [vmem:[%s1 + $0x1510] sm:$0xff]
    %v702 = vld [vmem:[%s1 + $0x1518] sm:$0xff]
    %v703 = vld [vmem:[%s1 + $0x1520] sm:$0xff]
    %v704 = vld [vmem:[%s1 + $0x1528] sm:$0xff]
    %v705 = vld [vmem:[%s1 + $0x1530] sm:$0xff]
    %v706 = vld [vmem:[%s1 + $0x1538] sm:$0xff]
    %v707 = vld [vmem:[%s1 + $0x1540] sm:$0xff]
    %v708 = vld [vmem:[%s1 + $0x1548] sm:$0xff]
    %v709 = vld [vmem:[%s1 + $0x1550] sm:$0xff]
    %v710 = vld [vmem:[%s1 + $0x1558] sm:$0xff]
    %v711 = vld [vmem:[%s1 + $0x1560] sm:$0xff]
    %v712 = vld [vmem:[%s1 + $0x1568] sm:$0xff]
    %v713 = vld [vmem:[%s1 + $0x1570] sm:$0xff]
    %v714 = vld [vmem:[%s1 + $0x1578] sm:$0xff]
    %v715 = vld [vmem:[%s1 + $0x1580] sm:$0xff]
    %v716 = vld [vmem:[%s1 + $0x1588] sm:$0xff]
    %v717 = vld [vmem:[%s1 + $0x1590] sm:$0xff]
    %v718 = vld [vmem:[%s1 + $0x1598] sm:$0xff]
    %v719 = vld [vmem:[%s1 + $0x15a0] sm:$0xff]
    %v720 = vld [vmem:[%s1 + $0x15a8] sm:$0xff]
    %v721 = vld [vmem:[%s1 + $0x15b0] sm:$0xff]
    %v722 = vld [vmem:[%s1 + $0x15b8] sm:$0xff]
    %v723 = vld [vmem:[%s1 + $0x15c0] sm:$0xff]
    %v724 = vld [vmem:[%s1 + $0x15c8] sm:$0xff]
    %v725 = vld [vmem:[%s1 + $0x15d0] sm:$0xff]
    %v726 = vld [vmem:[%s1 + $0x15d8] sm:$0xff]
    %v727 = vld [vmem:[%s1 + $0x15e0] sm:$0xff]
    %v728 = vld [vmem:[%s1 + $0x15e8] sm:$0xff]
    %v729 = vld [vmem:[%s1 + $0x15f0] sm:$0xff]
    %v730 = vld [vmem:[%s1 + $0x15f8] sm:$0xff]
    %v731 = vld [vmem:[%s1 + $0x1600] sm:$0xff]
    %v732 = vld [vmem:[%s1 + $0x1608] sm:$0xff]
    %v733 = vld [vmem:[%s1 + $0x1610] sm:$0xff]
    %v734 = vld [vmem:[%s1 + $0x1618] sm:$0xff]
    %v735 = vld [vmem:[%s1 + $0x1620] sm:$0xff]
    %v736 = vld [vmem:[%s1 + $0x1628] sm:$0xff]
    %v737 = vld [vmem:[%s1 + $0x1630] sm:$0xff]
    %v738 = vld [vmem:[%s1 + $0x1638] sm:$0xff]
    %v739 = vld [vmem:[%s1 + $0x1640] sm:$0xff]
    %v740 = vld [vmem:[%s1 + $0x1648] sm:$0xff]
    %v741 = vld [vmem:[%s1 + $0x1650] sm:$0xff]
    %v742 = vld [vmem:[%s1 + $0x1658] sm:$0xff]
    %v743 = vld [vmem:[%s1 + $0x1660] sm:$0xff]
    %v744 = vld [vmem:[%s1 + $0x1668] sm:$0xff]
    %v745 = vld [vmem:[%s1 + $0x1670] sm:$0xff]
    %v746 = vld [vmem:[%s1 + $0x1678] sm:$0xff]
    %v747 = vld [vmem:[%s1 + $0x1680] sm:$0xff]
    %v748 = vld [vmem:[%s1 + $0x1688] sm:$0xff]
    %v749 = vld [vmem:[%s1 + $0x1690] sm:$0xff]
    %v750 = vld [vmem:[%s1 + $0x1698] sm:$0xff]
    %v751 = vld [vmem:[%s1 + $0x16a0] sm:$0xff]
    %v752 = vld [vmem:[%s1 + $0x16a8] sm:$0xff]
    %v753 = vld [vmem:[%s1 + $0x16b0] sm:$0xff]
    %v754 = vld [vmem:[%s1 + $0x16b8] sm:$0xff]
    %v755 = vld [vmem:[%s1 + $0x16c0] sm:$0xff]
    %v756 = vld [vmem:[%s1 + $0x16c8] sm:$0xff]
    %v757 = vld [vmem:[%s1 + $0x16d0] sm:$0xff]
    %v758 = vld [vmem:[%s1 + $0x16d8] sm:$0xff]
    %v759 = vld [vmem:[%s1 + $0x16e0] sm:$0xff]
    %v760 = vld [vmem:[%s1 + $0x16e8] sm:$0xff]
    %v761 = vld [vmem:[%s1 + $0x16f0] sm:$0xff]
    %v762 = vld [vmem:[%s1 + $0x16f8] sm:$0xff]
    %v763 = vld [vmem:[%s1 + $0x1700] sm:$0xff]
    %v764 = vld [vmem:[%s1 + $0x1708] sm:$0xff]
    %v765 = vld [vmem:[%s1 + $0x1710] sm:$0xff]
    %v766 = vld [vmem:[%s1 + $0x1718] sm:$0xff]
    %v767 = vld [vmem:[%s1 + $0x1720] sm:$0xff]
    %v768 = vld [vmem:[%s1 + $0x1728] sm:$0xff]
    %v769 = vld [vmem:[%s1 + $0x1730] sm:$0xff]
    %v770 = vld [vmem:[%s1 + $0x1738] sm:$0xff]
    %v771 = vld [vmem:[%s1 + $0x1740] sm:$0xff]
    %v772 = vld [vmem:[%s1 + $0x1748] sm:$0xff]
    %v773 = vld [vmem:[%s1 + $0x1750] sm:$0xff]
    %v774 = vld [vmem:[%s1 + $0x1758] sm:$0xff]
    %v775 = vld [vmem:[%s1 + $0x1760] sm:$0xff]
    %v776 = vld [vmem:[%s1 + $0x1768] sm:$0xff]
    %v777 = vld [vmem:[%s1 + $0x1770] sm:$0xff]
    %v778 = vld [vmem:[%s1 + $0x1778] sm:$0xff]
    %v779 = vld [vmem:[%s1 + $0x1780] sm:$0xff]
    %v780 = vld [vmem:[%s1 + $0x1788] sm:$0xff]
    %v781 = vld [vmem:[%s1 + $0x1790] sm:$0xff]
    %v782 = vld [vmem:[%s1 + $0x1798] sm:$0xff]
    %v783 = vld [vmem:[%s1 + $0x17a0] sm:$0xff]
    %v784 = vld [vmem:[%s1 + $0x17a8] sm:$0xff]
    %v785 = vld [vmem:[%s1 + $0x17b0] sm:$0xff]
    %v786 = vld [vmem:[%s1 + $0x17b8] sm:$0xff]
    %v787 = vld [vmem:[%s1 + $0x17c0] sm:$0xff]
    %v788 = vld [vmem:[%s1 + $0x17c8] sm:$0xff]
    %v789 = vld [vmem:[%s1 + $0x17d0] sm:$0xff]
    %v790 = vld [vmem:[%s1 + $0x17d8] sm:$0xff]
    %v791 = vld [vmem:[%s1 + $0x17e0] sm:$0xff]
    %v792 = vld [vmem:[%s1 + $0x17e8] sm:$0xff]
    %v793 = vld [vmem:[%s1 + $0x17f0] sm:$0xff]
    %v794 = vld [vmem:[%s1 + $0x17f8] sm:$0xff]
    %v795 = vld [vmem:[%s2] sm:$0x1]
    %v797 = vlaneseq
    %v798 = vshrl.u32 %v797, 7
    %v799 = vsub.s32 0, %v798
    %v800 = vrot.slane %v795, %v799
    %v814 = vcombine.high %v15, %v15
    %v816 = vunpack.c.l.s4 1983009808
    %v817 = vunpack.c.0.s8 %v816
    %v818 = vlaneseq
    %v819 = vshrl.u32 %v818, 7
    %v820 = vsub.s32 %v817, %v819
    %v821 = vrot.slane %v15, %v820
    %v823 = vunpack.c.l.s4 1983009808
    %v824 = vunpack.c.0.s8 %v823
    %v825 = vlaneseq
    %v826 = vshrl.u32 %v825, 7
    %v827 = vsub.s32 %v824, %v826
    %v828 = vrot.slane %v814, %v827
    %v829 = vcombine.high %v821, %v821
    %v830 = vcombine.high %v828, %v828
    %v831 = vcombine.high %v16, %v16
    %v833 = vunpack.c.l.s4 1983009808
    %v834 = vunpack.c.0.s8 %v833
    %v835 = vlaneseq
    %v836 = vshrl.u32 %v835, 7
    %v837 = vsub.s32 %v834, %v836
    %v838 = vrot.slane %v16, %v837
    %v840 = vunpack.c.l.s4 1983009808
    %v841 = vunpack.c.0.s8 %v840
    %v842 = vlaneseq
    %v843 = vshrl.u32 %v842, 7
    %v844 = vsub.s32 %v841, %v843
    %v845 = vrot.slane %v831, %v844
    %v846 = vcombine.high %v838, %v838
    %v847 = vcombine.high %v845, %v845
    %v848 = vcombine.high %v17, %v17
    %v850 = vunpack.c.l.s4 1983009808
    %v851 = vunpack.c.0.s8 %v850
    %v852 = vlaneseq
    %v853 = vshrl.u32 %v852, 7
    %v854 = vsub.s32 %v851, %v853
    %v855 = vrot.slane %v17, %v854
    %v857 = vunpack.c.l.s4 1983009808
    %v858 = vunpack.c.0.s8 %v857
    %v859 = vlaneseq
    %v860 = vshrl.u32 %v859, 7
    %v861 = vsub.s32 %v858, %v860
    %v862 = vrot.slane %v848, %v861
    %v863 = vcombine.high %v855, %v855
    %v864 = vcombine.high %v862, %v862
    %v865 = vcombine.high %v18, %v18
    %v867 = vunpack.c.l.s4 1983009808
    %v868 = vunpack.c.0.s8 %v867
    %v869 = vlaneseq
    %v870 = vshrl.u32 %v869, 7
    %v871 = vsub.s32 %v868, %v870
    %v872 = vrot.slane %v18, %v871
    %v874 = vunpack.c.l.s4 1983009808
    %v875 = vunpack.c.0.s8 %v874
    %v876 = vlaneseq
    %v877 = vshrl.u32 %v876, 7
    %v878 = vsub.s32 %v875, %v877
    %v879 = vrot.slane %v865, %v878
    %v880 = vcombine.high %v872, %v872
    %v881 = vcombine.high %v879, %v879
    %v882 = vcombine.high %v19, %v19
    %v884 = vunpack.c.l.s4 1983009808
    %v885 = vunpack.c.0.s8 %v884
    %v886 = vlaneseq
    %v887 = vshrl.u32 %v886, 7
    %v888 = vsub.s32 %v885, %v887
    %v889 = vrot.slane %v19, %v888
    %v891 = vunpack.c.l.s4 1983009808
    %v892 = vunpack.c.0.s8 %v891
    %v893 = vlaneseq
    %v894 = vshrl.u32 %v893, 7
    %v895 = vsub.s32 %v892, %v894
    %v896 = vrot.slane %v882, %v895
    %v897 = vcombine.high %v889, %v889
    %v898 = vcombine.high %v896, %v896
    %v899 = vcombine.high %v20, %v20
    %v901 = vunpack.c.l.s4 1983009808
    %v902 = vunpack.c.0.s8 %v901
    %v903 = vlaneseq
    %v904 = vshrl.u32 %v903, 7
    %v905 = vsub.s32 %v902, %v904
    %v906 = vrot.slane %v20, %v905
    %v908 = vunpack.c.l.s4 1983009808
    %v909 = vunpack.c.0.s8 %v908
    %v910 = vlaneseq
    %v911 = vshrl.u32 %v910, 7
    %v912 = vsub.s32 %v909, %v911
    %v913 = vrot.slane %v899, %v912
    %v914 = vcombine.high %v906, %v906
    %v915 = vcombine.high %v913, %v913
    %v916 = vcombine.high %v21, %v21
    %v918 = vunpack.c.l.s4 1983009808
    %v919 = vunpack.c.0.s8 %v918
    %v920 = vlaneseq
    %v921 = vshrl.u32 %v920, 7
    %v922 = vsub.s32 %v919, %v921
    %v923 = vrot.slane %v21, %v922
    %v925 = vunpack.c.l.s4 1983009808
    %v926 = vunpack.c.0.s8 %v925
    %v927 = vlaneseq
    %v928 = vshrl.u32 %v927, 7
    %v929 = vsub.s32 %v926, %v928
    %v930 = vrot.slane %v916, %v929
    %v931 = vcombine.high %v923, %v923
    %v932 = vcombine.high %v930, %v930
    %v933 = vcombine.high %v22, %v22
    %v935 = vunpack.c.l.s4 1983009808
    %v936 = vunpack.c.0.s8 %v935
    %v937 = vlaneseq
    %v938 = vshrl.u32 %v937, 7
    %v939 = vsub.s32 %v936, %v938
    %v940 = vrot.slane %v22, %v939
    %v942 = vunpack.c.l.s4 1983009808
    %v943 = vunpack.c.0.s8 %v942
    %v944 = vlaneseq
    %v945 = vshrl.u32 %v944, 7
    %v946 = vsub.s32 %v943, %v945
    %v947 = vrot.slane %v933, %v946
    %v948 = vcombine.high %v940, %v940
    %v949 = vcombine.high %v947, %v947
    %v950 = vcombine.high %v23, %v23
    %v952 = vunpack.c.l.s4 1983009808
    %v953 = vunpack.c.0.s8 %v952
    %v954 = vlaneseq
    %v955 = vshrl.u32 %v954, 7
    %v956 = vsub.s32 %v953, %v955
    %v957 = vrot.slane %v23, %v956
    %v959 = vunpack.c.l.s4 1983009808
    %v960 = vunpack.c.0.s8 %v959
    %v961 = vlaneseq
    %v962 = vshrl.u32 %v961, 7
    %v963 = vsub.s32 %v960, %v962
    %v964 = vrot.slane %v950, %v963
    %v965 = vcombine.high %v957, %v957
    %v966 = vcombine.high %v964, %v964
    %v967 = vcombine.high %v24, %v24
    %v969 = vunpack.c.l.s4 1983009808
    %v970 = vunpack.c.0.s8 %v969
    %v971 = vlaneseq
    %v972 = vshrl.u32 %v971, 7
    %v973 = vsub.s32 %v970, %v972
    %v974 = vrot.slane %v24, %v973
    %v976 = vunpack.c.l.s4 1983009808
    %v977 = vunpack.c.0.s8 %v976
    %v978 = vlaneseq
    %v979 = vshrl.u32 %v978, 7
    %v980 = vsub.s32 %v977, %v979
    %v981 = vrot.slane %v967, %v980
    %v982 = vcombine.high %v974, %v974
    %v983 = vcombine.high %v981, %v981
    %v984 = vcombine.high %v25, %v25
    %v986 = vunpack.c.l.s4 1983009808
    %v987 = vunpack.c.0.s8 %v986
    %v988 = vlaneseq
    %v989 = vshrl.u32 %v988, 7
    %v990 = vsub.s32 %v987, %v989
    %v991 = vrot.slane %v25, %v990
    %v993 = vunpack.c.l.s4 1983009808
    %v994 = vunpack.c.0.s8 %v993
    %v995 = vlaneseq
    %v996 = vshrl.u32 %v995, 7
    %v997 = vsub.s32 %v994, %v996
    %v998 = vrot.slane %v984, %v997
    %v999 = vcombine.high %v991, %v991
    %v1000 = vcombine.high %v998, %v998
    %v1001 = vcombine.high %v26, %v26
    %v1003 = vunpack.c.l.s4 1983009808
    %v1004 = vunpack.c.0.s8 %v1003
    %v1005 = vlaneseq
    %v1006 = vshrl.u32 %v1005, 7
    %v1007 = vsub.s32 %v1004, %v1006
    %v1008 = vrot.slane %v26, %v1007
    %v1010 = vunpack.c.l.s4 1983009808
    %v1011 = vunpack.c.0.s8 %v1010
    %v1012 = vlaneseq
    %v1013 = vshrl.u32 %v1012, 7
    %v1014 = vsub.s32 %v1011, %v1013
    %v1015 = vrot.slane %v1001, %v1014
    %v1016 = vcombine.high %v1008, %v1008
    %v1017 = vcombine.high %v1015, %v1015
    %1066 = vmatprep.subr.mxu0 0.0
    %1067 = vmatpush1.msra.mxu0 %v27
    %1068 = vmatprep.subr.mxu0 0.0
    %1069 = vmatpush1.msra.mxu0 %v28
    %1070 = vmatprep.subr.mxu0 0.0
    %1071 = vmatpush1.msra.mxu0 %v29
    %1072 = vmatprep.subr.mxu0 0.0
    %1073 = vmatpush1.msra.mxu0 %v30
    %1074 = vmatprep.subr.mxu0 0.0
    %1075 = vmatpush1.msra.mxu0 %v31
    %1076 = vmatprep.subr.mxu0 0.0
    %1077 = vmatpush1.msra.mxu0 %v32
    %1078 = vmatprep.subr.mxu0 0.0
    %1079 = vmatpush1.msra.mxu0 %v33
    %1080 = vmatprep.subr.mxu0 0.0
    %1081 = vmatpush1.msra.mxu0 %v34
    %1082 = vmatprep.subr.mxu0 0.0
    %1083 = vmatpush1.msra.mxu0 %v35
    %1084 = vmatprep.subr.mxu0 0.0
    %1085 = vmatpush1.msra.mxu0 %v36
    %1086 = vmatprep.subr.mxu0 0.0
    %1087 = vmatpush1.msra.mxu0 %v37
    %1088 = vmatprep.subr.mxu0 0.0
    %1089 = vmatpush1.msra.mxu0 %v38
    %1090 = vmatprep.subr.mxu0 0.0
    %1091 = vmatpush1.msra.mxu0 %v39
    %1092 = vmatprep.subr.mxu0 0.0
    %1093 = vmatpush1.msra.mxu0 %v40
    %1094 = vmatprep.subr.mxu0 0.0
    %1095 = vmatpush1.msra.mxu0 %v41
    %1096 = vmatprep.subr.mxu0 0.0
    %1097 = vmatpush1.msra.mxu0 %v42
    %1098 = vmatprep.subr.mxu0 0.0
    %1099 = vmatpush1.msra.mxu0 %v43
    %1100 = vmatprep.subr.mxu0 0.0
    %1101 = vmatpush1.msra.mxu0 %v44
    %1102 = vmatprep.subr.mxu0 0.0
    %1103 = vmatpush1.msra.mxu0 %v45
    %1104 = vmatprep.subr.mxu0 0.0
    %1105 = vmatpush1.msra.mxu0 %v46
    %1106 = vmatprep.subr.mxu0 0.0
    %1107 = vmatpush1.msra.mxu0 %v47
    %1108 = vmatprep.subr.mxu0 0.0
    %1109 = vmatpush1.msra.mxu0 %v48
    %1110 = vmatprep.subr.mxu0 0.0
    %1111 = vmatpush1.msra.mxu0 %v49
    %1112 = vmatprep.subr.mxu0 0.0
    %1113 = vmatpush1.msra.mxu0 %v50
    %1114 = vmatprep.subr.mxu0 0.0
    %1115 = vmatpush1.msra.mxu0 %v51
    %1116 = vmatprep.subr.mxu0 0.0
    %1117 = vmatpush1.msra.mxu0 %v52
    %1118 = vmatprep.subr.mxu0 0.0
    %1119 = vmatpush1.msra.mxu0 %v53
    %1120 = vmatprep.subr.mxu0 0.0
    %1121 = vmatpush1.msra.mxu0 %v54
    %1122 = vmatprep.subr.mxu0 0.0
    %1123 = vmatpush1.msra.mxu0 %v55
    %1124 = vmatprep.subr.mxu0 0.0
    %1125 = vmatpush1.msra.mxu0 %v56
    %1126 = vmatprep.subr.mxu0 0.0
    %1127 = vmatpush1.msra.mxu0 %v57
    %1128 = vmatprep.subr.mxu0 0.0
    %1129 = vmatpush1.msra.mxu0 %v58
    %1130 = vmatprep.mubr.f32.mxu0 %v829
    %1131 = vmatmul.mubr.f32.gmra.mrb[0].mxu0 %v821
    %v1132 = vpop.f32.mrb[0].mxu0
    %v1133 = vadd.f32 %v800, %v1132
    %v1134 = vpop.f32.mrb[0].mxu0
    %1135 = vdwg.mxu0
    %1136 = vmatprep.subr.mxu0 0.0
    %1137 = vmatpush1.msra.mxu0 %v59
    %1138 = vmatprep.subr.mxu0 0.0
    %1139 = vmatpush1.msra.mxu0 %v60
    %1140 = vmatprep.subr.mxu0 0.0
    %1141 = vmatpush1.msra.mxu0 %v61
    %1142 = vmatprep.subr.mxu0 0.0
    %1143 = vmatpush1.msra.mxu0 %v62
    %1144 = vmatprep.subr.mxu0 0.0
    %1145 = vmatpush1.msra.mxu0 %v63
    %1146 = vmatprep.subr.mxu0 0.0
    %1147 = vmatpush1.msra.mxu0 %v64
    %1148 = vmatprep.subr.mxu0 0.0
    %1149 = vmatpush1.msra.mxu0 %v65
    %1150 = vmatprep.subr.mxu0 0.0
    %1151 = vmatpush1.msra.mxu0 %v66
    %1152 = vmatprep.subr.mxu0 0.0
    %1153 = vmatpush1.msra.mxu0 %v67
    %1154 = vmatprep.subr.mxu0 0.0
    %1155 = vmatpush1.msra.mxu0 %v68
    %1156 = vmatprep.subr.mxu0 0.0
    %1157 = vmatpush1.msra.mxu0 %v69
    %1158 = vmatprep.subr.mxu0 0.0
    %1159 = vmatpush1.msra.mxu0 %v70
    %1160 = vmatprep.subr.mxu0 0.0
    %1161 = vmatpush1.msra.mxu0 %v71
    %1162 = vmatprep.subr.mxu0 0.0
    %1163 = vmatpush1.msra.mxu0 %v72
    %1164 = vmatprep.subr.mxu0 0.0
    %1165 = vmatpush1.msra.mxu0 %v73
    %1166 = vmatprep.subr.mxu0 0.0
    %1167 = vmatpush1.msra.mxu0 %v74
    %1168 = vmatprep.subr.mxu0 0.0
    %1169 = vmatpush1.msra.mxu0 %v75
    %1170 = vmatprep.subr.mxu0 0.0
    %1171 = vmatpush1.msra.mxu0 %v76
    %1172 = vmatprep.subr.mxu0 0.0
    %1173 = vmatpush1.msra.mxu0 %v77
    %1174 = vmatprep.subr.mxu0 0.0
    %1175 = vmatpush1.msra.mxu0 %v78
    %1176 = vmatprep.subr.mxu0 0.0
    %1177 = vmatpush1.msra.mxu0 %v79
    %1178 = vmatprep.subr.mxu0 0.0
    %1179 = vmatpush1.msra.mxu0 %v80
    %1180 = vmatprep.subr.mxu0 0.0
    %1181 = vmatpush1.msra.mxu0 %v81
    %1182 = vmatprep.subr.mxu0 0.0
    %1183 = vmatpush1.msra.mxu0 %v82
    %1184 = vmatprep.subr.mxu0 0.0
    %1185 = vmatpush1.msra.mxu0 %v83
    %1186 = vmatprep.subr.mxu0 0.0
    %1187 = vmatpush1.msra.mxu0 %v84
    %1188 = vmatprep.subr.mxu0 0.0
    %1189 = vmatpush1.msra.mxu0 %v85
    %1190 = vmatprep.subr.mxu0 0.0
    %1191 = vmatpush1.msra.mxu0 %v86
    %1192 = vmatprep.subr.mxu0 0.0
    %1193 = vmatpush1.msra.mxu0 %v87
    %1194 = vmatprep.subr.mxu0 0.0
    %1195 = vmatpush1.msra.mxu0 %v88
    %1196 = vmatprep.subr.mxu0 0.0
    %1197 = vmatpush1.msra.mxu0 %v89
    %1198 = vmatprep.subr.mxu0 0.0
    %1199 = vmatpush1.msra.mxu0 %v90
    %1200 = vmatprep.mubr.f32.mxu0 %v830
    %1201 = vmatmul.mubr.f32.gmra.mrb[0].mxu0 %v828
    %v1202 = vpop.f32.mrb[0].mxu0
    %v1203 = vadd.f32 %v1133, %v1202
    %v1204 = vpop.f32.mrb[0].mxu0
    %1205 = vdwg.mxu0
    %1206 = vmatprep.subr.mxu0 0.0
    %1207 = vmatpush1.msra.mxu0 %v91
    %1208 = vmatprep.subr.mxu0 0.0
    %1209 = vmatpush1.msra.mxu0 %v92
    %1210 = vmatprep.subr.mxu0 0.0
    %1211 = vmatpush1.msra.mxu0 %v93
    %1212 = vmatprep.subr.mxu0 0.0
    %1213 = vmatpush1.msra.mxu0 %v94
    %1214 = vmatprep.subr.mxu0 0.0
    %1215 = vmatpush1.msra.mxu0 %v95
    %1216 = vmatprep.subr.mxu0 0.0
    %1217 = vmatpush1.msra.mxu0 %v96
    %1218 = vmatprep.subr.mxu0 0.0
    %1219 = vmatpush1.msra.mxu0 %v97
    %1220 = vmatprep.subr.mxu0 0.0
    %1221 = vmatpush1.msra.mxu0 %v98
    %1222 = vmatprep.subr.mxu0 0.0
    %1223 = vmatpush1.msra.mxu0 %v99
    %1224 = vmatprep.subr.mxu0 0.0
    %1225 = vmatpush1.msra.mxu0 %v100
    %1226 = vmatprep.subr.mxu0 0.0
    %1227 = vmatpush1.msra.mxu0 %v101
    %1228 = vmatprep.subr.mxu0 0.0
    %1229 = vmatpush1.msra.mxu0 %v102
    %1230 = vmatprep.subr.mxu0 0.0
    %1231 = vmatpush1.msra.mxu0 %v103
    %1232 = vmatprep.subr.mxu0 0.0
    %1233 = vmatpush1.msra.mxu0 %v104
    %1234 = vmatprep.subr.mxu0 0.0
    %1235 = vmatpush1.msra.mxu0 %v105
    %1236 = vmatprep.subr.mxu0 0.0
    %1237 = vmatpush1.msra.mxu0 %v106
    %1238 = vmatprep.subr.mxu0 0.0
    %1239 = vmatpush1.msra.mxu0 %v107
    %1240 = vmatprep.subr.mxu0 0.0
    %1241 = vmatpush1.msra.mxu0 %v108
    %1242 = vmatprep.subr.mxu0 0.0
    %1243 = vmatpush1.msra.mxu0 %v109
    %1244 = vmatprep.subr.mxu0 0.0
    %1245 = vmatpush1.msra.mxu0 %v110
    %1246 = vmatprep.subr.mxu0 0.0
    %1247 = vmatpush1.msra.mxu0 %v111
    %1248 = vmatprep.subr.mxu0 0.0
    %1249 = vmatpush1.msra.mxu0 %v112
    %1250 = vmatprep.subr.mxu0 0.0
    %1251 = vmatpush1.msra.mxu0 %v113
    %1252 = vmatprep.subr.mxu0 0.0
    %1253 = vmatpush1.msra.mxu0 %v114
    %1254 = vmatprep.subr.mxu0 0.0
    %1255 = vmatpush1.msra.mxu0 %v115
    %1256 = vmatprep.subr.mxu0 0.0
    %1257 = vmatpush1.msra.mxu0 %v116
    %1258 = vmatprep.subr.mxu0 0.0
    %1259 = vmatpush1.msra.mxu0 %v117
    %1260 = vmatprep.subr.mxu0 0.0
    %1261 = vmatpush1.msra.mxu0 %v118
    %1262 = vmatprep.subr.mxu0 0.0
    %1263 = vmatpush1.msra.mxu0 %v119
    %1264 = vmatprep.subr.mxu0 0.0
    %1265 = vmatpush1.msra.mxu0 %v120
    %1266 = vmatprep.subr.mxu0 0.0
    %1267 = vmatpush1.msra.mxu0 %v121
    %1268 = vmatprep.subr.mxu0 0.0
    %1269 = vmatpush1.msra.mxu0 %v122
    %1270 = vmatprep.mubr.f32.mxu0 %v846
    %1271 = vmatmul.mubr.f32.gmra.mrb[0].mxu0 %v838
    %v1272 = vpop.f32.mrb[0].mxu0
    %v1273 = vadd.f32 %v1203, %v1272
    %v1274 = vpop.f32.mrb[0].mxu0
    %1275 = vdwg.mxu0
    %1276 = vmatprep.subr.mxu0 0.0
    %1277 = vmatpush1.msra.mxu0 %v123
    %1278 = vmatprep.subr.mxu0 0.0
    %1279 = vmatpush1.msra.mxu0 %v124
    %1280 = vmatprep.subr.mxu0 0.0
    %1281 = vmatpush1.msra.mxu0 %v125
    %1282 = vmatprep.subr.mxu0 0.0
    %1283 = vmatpush1.msra.mxu0 %v126
    %1284 = vmatprep.subr.mxu0 0.0
    %1285 = vmatpush1.msra.mxu0 %v127
    %1286 = vmatprep.subr.mxu0 0.0
    %1287 = vmatpush1.msra.mxu0 %v128
    %1288 = vmatprep.subr.mxu0 0.0
    %1289 = vmatpush1.msra.mxu0 %v129
    %1290 = vmatprep.subr.mxu0 0.0
    %1291 = vmatpush1.msra.mxu0 %v130
    %1292 = vmatprep.subr.mxu0 0.0
    %1293 = vmatpush1.msra.mxu0 %v131
    %1294 = vmatprep.subr.mxu0 0.0
    %1295 = vmatpush1.msra.mxu0 %v132
    %1296 = vmatprep.subr.mxu0 0.0
    %1297 = vmatpush1.msra.mxu0 %v133
    %1298 = vmatprep.subr.mxu0 0.0
    %1299 = vmatpush1.msra.mxu0 %v134
    %1300 = vmatprep.subr.mxu0 0.0
    %1301 = vmatpush1.msra.mxu0 %v135
    %1302 = vmatprep.subr.mxu0 0.0
    %1303 = vmatpush1.msra.mxu0 %v136
    %1304 = vmatprep.subr.mxu0 0.0
    %1305 = vmatpush1.msra.mxu0 %v137
    %1306 = vmatprep.subr.mxu0 0.0
    %1307 = vmatpush1.msra.mxu0 %v138
    %1308 = vmatprep.subr.mxu0 0.0
    %1309 = vmatpush1.msra.mxu0 %v139
    %1310 = vmatprep.subr.mxu0 0.0
    %1311 = vmatpush1.msra.mxu0 %v140
    %1312 = vmatprep.subr.mxu0 0.0
    %1313 = vmatpush1.msra.mxu0 %v141
    %1314 = vmatprep.subr.mxu0 0.0
    %1315 = vmatpush1.msra.mxu0 %v142
    %1316 = vmatprep.subr.mxu0 0.0
    %1317 = vmatpush1.msra.mxu0 %v143
    %1318 = vmatprep.subr.mxu0 0.0
    %1319 = vmatpush1.msra.mxu0 %v144
    %1320 = vmatprep.subr.mxu0 0.0
    %1321 = vmatpush1.msra.mxu0 %v145
    %1322 = vmatprep.subr.mxu0 0.0
    %1323 = vmatpush1.msra.mxu0 %v146
    %1324 = vmatprep.subr.mxu0 0.0
    %1325 = vmatpush1.msra.mxu0 %v147
    %1326 = vmatprep.subr.mxu0 0.0
    %1327 = vmatpush1.msra.mxu0 %v148
    %1328 = vmatprep.subr.mxu0 0.0
    %1329 = vmatpush1.msra.mxu0 %v149
    %1330 = vmatprep.subr.mxu0 0.0
    %1331 = vmatpush1.msra.mxu0 %v150
    %1332 = vmatprep.subr.mxu0 0.0
    %1333 = vmatpush1.msra.mxu0 %v151
    %1334 = vmatprep.subr.mxu0 0.0
    %1335 = vmatpush1.msra.mxu0 %v152
    %1336 = vmatprep.subr.mxu0 0.0
    %1337 = vmatpush1.msra.mxu0 %v153
    %1338 = vmatprep.subr.mxu0 0.0
    %1339 = vmatpush1.msra.mxu0 %v154
    %1340 = vmatprep.mubr.f32.mxu0 %v847
    %1341 = vmatmul.mubr.f32.gmra.mrb[0].mxu0 %v845
    %v1342 = vpop.f32.mrb[0].mxu0
    %v1343 = vadd.f32 %v1273, %v1342
    %v1344 = vpop.f32.mrb[0].mxu0
    %1345 = vdwg.mxu0
    %1346 = vmatprep.subr.mxu0 0.0
    %1347 = vmatpush1.msra.mxu0 %v155
    %1348 = vmatprep.subr.mxu0 0.0
    %1349 = vmatpush1.msra.mxu0 %v156
    %1350 = vmatprep.subr.mxu0 0.0
    %1351 = vmatpush1.msra.mxu0 %v157
    %1352 = vmatprep.subr.mxu0 0.0
    %1353 = vmatpush1.msra.mxu0 %v158
    %1354 = vmatprep.subr.mxu0 0.0
    %1355 = vmatpush1.msra.mxu0 %v159
    %1356 = vmatprep.subr.mxu0 0.0
    %1357 = vmatpush1.msra.mxu0 %v160
    %1358 = vmatprep.subr.mxu0 0.0
    %1359 = vmatpush1.msra.mxu0 %v161
    %1360 = vmatprep.subr.mxu0 0.0
    %1361 = vmatpush1.msra.mxu0 %v162
    %1362 = vmatprep.subr.mxu0 0.0
    %1363 = vmatpush1.msra.mxu0 %v163
    %1364 = vmatprep.subr.mxu0 0.0
    %1365 = vmatpush1.msra.mxu0 %v164
    %1366 = vmatprep.subr.mxu0 0.0
    %1367 = vmatpush1.msra.mxu0 %v165
    %1368 = vmatprep.subr.mxu0 0.0
    %1369 = vmatpush1.msra.mxu0 %v166
    %1370 = vmatprep.subr.mxu0 0.0
    %1371 = vmatpush1.msra.mxu0 %v167
    %1372 = vmatprep.subr.mxu0 0.0
    %1373 = vmatpush1.msra.mxu0 %v168
    %1374 = vmatprep.subr.mxu0 0.0
    %1375 = vmatpush1.msra.mxu0 %v169
    %1376 = vmatprep.subr.mxu0 0.0
    %1377 = vmatpush1.msra.mxu0 %v170
    %1378 = vmatprep.subr.mxu0 0.0
    %1379 = vmatpush1.msra.mxu0 %v171
    %1380 = vmatprep.subr.mxu0 0.0
    %1381 = vmatpush1.msra.mxu0 %v172
    %1382 = vmatprep.subr.mxu0 0.0
    %1383 = vmatpush1.msra.mxu0 %v173
    %1384 = vmatprep.subr.mxu0 0.0
    %1385 = vmatpush1.msra.mxu0 %v174
    %1386 = vmatprep.subr.mxu0 0.0
    %1387 = vmatpush1.msra.mxu0 %v175
    %1388 = vmatprep.subr.mxu0 0.0
    %1389 = vmatpush1.msra.mxu0 %v176
    %1390 = vmatprep.subr.mxu0 0.0
    %1391 = vmatpush1.msra.mxu0 %v177
    %1392 = vmatprep.subr.mxu0 0.0
    %1393 = vmatpush1.msra.mxu0 %v178
    %1394 = vmatprep.subr.mxu0 0.0
    %1395 = vmatpush1.msra.mxu0 %v179
    %1396 = vmatprep.subr.mxu0 0.0
    %1397 = vmatpush1.msra.mxu0 %v180
    %1398 = vmatprep.subr.mxu0 0.0
    %1399 = vmatpush1.msra.mxu0 %v181
    %1400 = vmatprep.subr.mxu0 0.0
    %1401 = vmatpush1.msra.mxu0 %v182
    %1402 = vmatprep.subr.mxu0 0.0
    %1403 = vmatpush1.msra.mxu0 %v183
    %1404 = vmatprep.subr.mxu0 0.0
    %1405 = vmatpush1.msra.mxu0 %v184
    %1406 = vmatprep.subr.mxu0 0.0
    %1407 = vmatpush1.msra.mxu0 %v185
    %1408 = vmatprep.subr.mxu0 0.0
    %1409 = vmatpush1.msra.mxu0 %v186
    %1410 = vmatprep.mubr.f32.mxu0 %v863
    %1411 = vmatmul.mubr.f32.gmra.mrb[0].mxu0 %v855
    %v1412 = vpop.f32.mrb[0].mxu0
    %v1413 = vadd.f32 %v1343, %v1412
    %v1414 = vpop.f32.mrb[0].mxu0
    %1415 = vdwg.mxu0
    %1416 = vmatprep.subr.mxu0 0.0
    %1417 = vmatpush1.msra.mxu0 %v187
    %1418 = vmatprep.subr.mxu0 0.0
    %1419 = vmatpush1.msra.mxu0 %v188
    %1420 = vmatprep.subr.mxu0 0.0
    %1421 = vmatpush1.msra.mxu0 %v189
    %1422 = vmatprep.subr.mxu0 0.0
    %1423 = vmatpush1.msra.mxu0 %v190
    %1424 = vmatprep.subr.mxu0 0.0
    %1425 = vmatpush1.msra.mxu0 %v191
    %1426 = vmatprep.subr.mxu0 0.0
    %1427 = vmatpush1.msra.mxu0 %v192
    %1428 = vmatprep.subr.mxu0 0.0
    %1429 = vmatpush1.msra.mxu0 %v193
    %1430 = vmatprep.subr.mxu0 0.0
    %1431 = vmatpush1.msra.mxu0 %v194
    %1432 = vmatprep.subr.mxu0 0.0
    %1433 = vmatpush1.msra.mxu0 %v195
    %1434 = vmatprep.subr.mxu0 0.0
    %1435 = vmatpush1.msra.mxu0 %v196
    %1436 = vmatprep.subr.mxu0 0.0
    %1437 = vmatpush1.msra.mxu0 %v197
    %1438 = vmatprep.subr.mxu0 0.0
    %1439 = vmatpush1.msra.mxu0 %v198
    %1440 = vmatprep.subr.mxu0 0.0
    %1441 = vmatpush1.msra.mxu0 %v199
    %1442 = vmatprep.subr.mxu0 0.0
    %1443 = vmatpush1.msra.mxu0 %v200
    %1444 = vmatprep.subr.mxu0 0.0
    %1445 = vmatpush1.msra.mxu0 %v201
    %1446 = vmatprep.subr.mxu0 0.0
    %1447 = vmatpush1.msra.mxu0 %v202
    %1448 = vmatprep.subr.mxu0 0.0
    %1449 = vmatpush1.msra.mxu0 %v203
    %1450 = vmatprep.subr.mxu0 0.0
    %1451 = vmatpush1.msra.mxu0 %v204
    %1452 = vmatprep.subr.mxu0 0.0
    %1453 = vmatpush1.msra.mxu0 %v205
    %1454 = vmatprep.subr.mxu0 0.0
    %1455 = vmatpush1.msra.mxu0 %v206
    %1456 = vmatprep.subr.mxu0 0.0
    %1457 = vmatpush1.msra.mxu0 %v207
    %1458 = vmatprep.subr.mxu0 0.0
    %1459 = vmatpush1.msra.mxu0 %v208
    %1460 = vmatprep.subr.mxu0 0.0
    %1461 = vmatpush1.msra.mxu0 %v209
    %1462 = vmatprep.subr.mxu0 0.0
    %1463 = vmatpush1.msra.mxu0 %v210
    %1464 = vmatprep.subr.mxu0 0.0
    %1465 = vmatpush1.msra.mxu0 %v211
    %1466 = vmatprep.subr.mxu0 0.0
    %1467 = vmatpush1.msra.mxu0 %v212
    %1468 = vmatprep.subr.mxu0 0.0
    %1469 = vmatpush1.msra.mxu0 %v213
    %1470 = vmatprep.subr.mxu0 0.0
    %1471 = vmatpush1.msra.mxu0 %v214
    %1472 = vmatprep.subr.mxu0 0.0
    %1473 = vmatpush1.msra.mxu0 %v215
    %1474 = vmatprep.subr.mxu0 0.0
    %1475 = vmatpush1.msra.mxu0 %v216
    %1476 = vmatprep.subr.mxu0 0.0
    %1477 = vmatpush1.msra.mxu0 %v217
    %1478 = vmatprep.subr.mxu0 0.0
    %1479 = vmatpush1.msra.mxu0 %v218
    %1480 = vmatprep.mubr.f32.mxu0 %v864
    %1481 = vmatmul.mubr.f32.gmra.mrb[0].mxu0 %v862
    %v1482 = vpop.f32.mrb[0].mxu0
    %v1483 = vadd.f32 %v1413, %v1482
    %v1484 = vpop.f32.mrb[0].mxu0
    %1485 = vdwg.mxu0
    %1486 = vmatprep.subr.mxu0 0.0
    %1487 = vmatpush1.msra.mxu0 %v219
    %1488 = vmatprep.subr.mxu0 0.0
    %1489 = vmatpush1.msra.mxu0 %v220
    %1490 = vmatprep.subr.mxu0 0.0
    %1491 = vmatpush1.msra.mxu0 %v221
    %1492 = vmatprep.subr.mxu0 0.0
    %1493 = vmatpush1.msra.mxu0 %v222
    %1494 = vmatprep.subr.mxu0 0.0
    %1495 = vmatpush1.msra.mxu0 %v223
    %1496 = vmatprep.subr.mxu0 0.0
    %1497 = vmatpush1.msra.mxu0 %v224
    %1498 = vmatprep.subr.mxu0 0.0
    %1499 = vmatpush1.msra.mxu0 %v225
    %1500 = vmatprep.subr.mxu0 0.0
    %1501 = vmatpush1.msra.mxu0 %v226
    %1502 = vmatprep.subr.mxu0 0.0
    %1503 = vmatpush1.msra.mxu0 %v227
    %1504 = vmatprep.subr.mxu0 0.0
    %1505 = vmatpush1.msra.mxu0 %v228
    %1506 = vmatprep.subr.mxu0 0.0
    %1507 = vmatpush1.msra.mxu0 %v229
    %1508 = vmatprep.subr.mxu0 0.0
    %1509 = vmatpush1.msra.mxu0 %v230
    %1510 = vmatprep.subr.mxu0 0.0
    %1511 = vmatpush1.msra.mxu0 %v231
    %1512 = vmatprep.subr.mxu0 0.0
    %1513 = vmatpush1.msra.mxu0 %v232
    %1514 = vmatprep.subr.mxu0 0.0
    %1515 = vmatpush1.msra.mxu0 %v233
    %1516 = vmatprep.subr.mxu0 0.0
    %1517 = vmatpush1.msra.mxu0 %v234
    %1518 = vmatprep.subr.mxu0 0.0
    %1519 = vmatpush1.msra.mxu0 %v235
    %1520 = vmatprep.subr.mxu0 0.0
    %1521 = vmatpush1.msra.mxu0 %v236
    %1522 = vmatprep.subr.mxu0 0.0
    %1523 = vmatpush1.msra.mxu0 %v237
    %1524 = vmatprep.subr.mxu0 0.0
    %1525 = vmatpush1.msra.mxu0 %v238
    %1526 = vmatprep.subr.mxu0 0.0
    %1527 = vmatpush1.msra.mxu0 %v239
    %1528 = vmatprep.subr.mxu0 0.0
    %1529 = vmatpush1.msra.mxu0 %v240
    %1530 = vmatprep.subr.mxu0 0.0
    %1531 = vmatpush1.msra.mxu0 %v241
    %1532 = vmatprep.subr.mxu0 0.0
    %1533 = vmatpush1.msra.mxu0 %v242
    %1534 = vmatprep.subr.mxu0 0.0
    %1535 = vmatpush1.msra.mxu0 %v243
    %1536 = vmatprep.subr.mxu0 0.0
    %1537 = vmatpush1.msra.mxu0 %v244
    %1538 = vmatprep.subr.mxu0 0.0
    %1539 = vmatpush1.msra.mxu0 %v245
    %1540 = vmatprep.subr.mxu0 0.0
    %1541 = vmatpush1.msra.mxu0 %v246
    %1542 = vmatprep.subr.mxu0 0.0
    %1543 = vmatpush1.msra.mxu0 %v247
    %1544 = vmatprep.subr.mxu0 0.0
    %1545 = vmatpush1.msra.mxu0 %v248
    %1546 = vmatprep.subr.mxu0 0.0
    %1547 = vmatpush1.msra.mxu0 %v249
    %1548 = vmatprep.subr.mxu0 0.0
    %1549 = vmatpush1.msra.mxu0 %v250
    %1550 = vmatprep.mubr.f32.mxu0 %v880
    %1551 = vmatmul.mubr.f32.gmra.mrb[0].mxu0 %v872
    %v1552 = vpop.f32.mrb[0].mxu0
    %v1553 = vadd.f32 %v1483, %v1552
    %v1554 = vpop.f32.mrb[0].mxu0
    %1555 = vdwg.mxu0
    %1556 = vmatprep.subr.mxu0 0.0
    %1557 = vmatpush1.msra.mxu0 %v251
    %1558 = vmatprep.subr.mxu0 0.0
    %1559 = vmatpush1.msra.mxu0 %v252
    %1560 = vmatprep.subr.mxu0 0.0
    %1561 = vmatpush1.msra.mxu0 %v253
    %1562 = vmatprep.subr.mxu0 0.0
    %1563 = vmatpush1.msra.mxu0 %v254
    %1564 = vmatprep.subr.mxu0 0.0
    %1565 = vmatpush1.msra.mxu0 %v255
    %1566 = vmatprep.subr.mxu0 0.0
    %1567 = vmatpush1.msra.mxu0 %v256
    %1568 = vmatprep.subr.mxu0 0.0
    %1569 = vmatpush1.msra.mxu0 %v257
    %1570 = vmatprep.subr.mxu0 0.0
    %1571 = vmatpush1.msra.mxu0 %v258
    %1572 = vmatprep.subr.mxu0 0.0
    %1573 = vmatpush1.msra.mxu0 %v259
    %1574 = vmatprep.subr.mxu0 0.0
    %1575 = vmatpush1.msra.mxu0 %v260
    %1576 = vmatprep.subr.mxu0 0.0
    %1577 = vmatpush1.msra.mxu0 %v261
    %1578 = vmatprep.subr.mxu0 0.0
    %1579 = vmatpush1.msra.mxu0 %v262
    %1580 = vmatprep.subr.mxu0 0.0
    %1581 = vmatpush1.msra.mxu0 %v263
    %1582 = vmatprep.subr.mxu0 0.0
    %1583 = vmatpush1.msra.mxu0 %v264
    %1584 = vmatprep.subr.mxu0 0.0
    %1585 = vmatpush1.msra.mxu0 %v265
    %1586 = vmatprep.subr.mxu0 0.0
    %1587 = vmatpush1.msra.mxu0 %v266
    %1588 = vmatprep.subr.mxu0 0.0
    %1589 = vmatpush1.msra.mxu0 %v267
    %1590 = vmatprep.subr.mxu0 0.0
    %1591 = vmatpush1.msra.mxu0 %v268
    %1592 = vmatprep.subr.mxu0 0.0
    %1593 = vmatpush1.msra.mxu0 %v269
    %1594 = vmatprep.subr.mxu0 0.0
    %1595 = vmatpush1.msra.mxu0 %v270
    %1596 = vmatprep.subr.mxu0 0.0
    %1597 = vmatpush1.msra.mxu0 %v271
    %1598 = vmatprep.subr.mxu0 0.0
    %1599 = vmatpush1.msra.mxu0 %v272
    %1600 = vmatprep.subr.mxu0 0.0
    %1601 = vmatpush1.msra.mxu0 %v273
    %1602 = vmatprep.subr.mxu0 0.0
    %1603 = vmatpush1.msra.mxu0 %v274
    %1604 = vmatprep.subr.mxu0 0.0
    %1605 = vmatpush1.msra.mxu0 %v275
    %1606 = vmatprep.subr.mxu0 0.0
    %1607 = vmatpush1.msra.mxu0 %v276
    %1608 = vmatprep.subr.mxu0 0.0
    %1609 = vmatpush1.msra.mxu0 %v277
    %1610 = vmatprep.subr.mxu0 0.0
    %1611 = vmatpush1.msra.mxu0 %v278
    %1612 = vmatprep.subr.mxu0 0.0
    %1613 = vmatpush1.msra.mxu0 %v279
    %1614 = vmatprep.subr.mxu0 0.0
    %1615 = vmatpush1.msra.mxu0 %v280
    %1616 = vmatprep.subr.mxu0 0.0
    %1617 = vmatpush1.msra.mxu0 %v281
    %1618 = vmatprep.subr.mxu0 0.0
    %1619 = vmatpush1.msra.mxu0 %v282
    %1620 = vmatprep.mubr.f32.mxu0 %v881
    %1621 = vmatmul.mubr.f32.gmra.mrb[0].mxu0 %v879
    %v1622 = vpop.f32.mrb[0].mxu0
    %v1623 = vadd.f32 %v1553, %v1622
    %v1624 = vpop.f32.mrb[0].mxu0
    %1625 = vdwg.mxu0
    %1626 = vmatprep.subr.mxu0 0.0
    %1627 = vmatpush1.msra.mxu0 %v283
    %1628 = vmatprep.subr.mxu0 0.0
    %1629 = vmatpush1.msra.mxu0 %v284
    %1630 = vmatprep.subr.mxu0 0.0
    %1631 = vmatpush1.msra.mxu0 %v285
    %1632 = vmatprep.subr.mxu0 0.0
    %1633 = vmatpush1.msra.mxu0 %v286
    %1634 = vmatprep.subr.mxu0 0.0
    %1635 = vmatpush1.msra.mxu0 %v287
    %1636 = vmatprep.subr.mxu0 0.0
    %1637 = vmatpush1.msra.mxu0 %v288
    %1638 = vmatprep.subr.mxu0 0.0
    %1639 = vmatpush1.msra.mxu0 %v289
    %1640 = vmatprep.subr.mxu0 0.0
    %1641 = vmatpush1.msra.mxu0 %v290
    %1642 = vmatprep.subr.mxu0 0.0
    %1643 = vmatpush1.msra.mxu0 %v291
    %1644 = vmatprep.subr.mxu0 0.0
    %1645 = vmatpush1.msra.mxu0 %v292
    %1646 = vmatprep.subr.mxu0 0.0
    %1647 = vmatpush1.msra.mxu0 %v293
    %1648 = vmatprep.subr.mxu0 0.0
    %1649 = vmatpush1.msra.mxu0 %v294
    %1650 = vmatprep.subr.mxu0 0.0
    %1651 = vmatpush1.msra.mxu0 %v295
    %1652 = vmatprep.subr.mxu0 0.0
    %1653 = vmatpush1.msra.mxu0 %v296
    %1654 = vmatprep.subr.mxu0 0.0
    %1655 = vmatpush1.msra.mxu0 %v297
    %1656 = vmatprep.subr.mxu0 0.0
    %1657 = vmatpush1.msra.mxu0 %v298
    %1658 = vmatprep.subr.mxu0 0.0
    %1659 = vmatpush1.msra.mxu0 %v299
    %1660 = vmatprep.subr.mxu0 0.0
    %1661 = vmatpush1.msra.mxu0 %v300
    %1662 = vmatprep.subr.mxu0 0.0
    %1663 = vmatpush1.msra.mxu0 %v301
    %1664 = vmatprep.subr.mxu0 0.0
    %1665 = vmatpush1.msra.mxu0 %v302
    %1666 = vmatprep.subr.mxu0 0.0
    %1667 = vmatpush1.msra.mxu0 %v303
    %1668 = vmatprep.subr.mxu0 0.0
    %1669 = vmatpush1.msra.mxu0 %v304
    %1670 = vmatprep.subr.mxu0 0.0
    %1671 = vmatpush1.msra.mxu0 %v305
    %1672 = vmatprep.subr.mxu0 0.0
    %1673 = vmatpush1.msra.mxu0 %v306
    %1674 = vmatprep.subr.mxu0 0.0
    %1675 = vmatpush1.msra.mxu0 %v307
    %1676 = vmatprep.subr.mxu0 0.0
    %1677 = vmatpush1.msra.mxu0 %v308
    %1678 = vmatprep.subr.mxu0 0.0
    %1679 = vmatpush1.msra.mxu0 %v309
    %1680 = vmatprep.subr.mxu0 0.0
    %1681 = vmatpush1.msra.mxu0 %v310
    %1682 = vmatprep.subr.mxu0 0.0
    %1683 = vmatpush1.msra.mxu0 %v311
    %1684 = vmatprep.subr.mxu0 0.0
    %1685 = vmatpush1.msra.mxu0 %v312
    %1686 = vmatprep.subr.mxu0 0.0
    %1687 = vmatpush1.msra.mxu0 %v313
    %1688 = vmatprep.subr.mxu0 0.0
    %1689 = vmatpush1.msra.mxu0 %v314
    %1690 = vmatprep.mubr.f32.mxu0 %v897
    %1691 = vmatmul.mubr.f32.gmra.mrb[0].mxu0 %v889
    %v1692 = vpop.f32.mrb[0].mxu0
    %v1693 = vadd.f32 %v1623, %v1692
    %v1694 = vpop.f32.mrb[0].mxu0
    %1695 = vdwg.mxu0
    %1696 = vmatprep.subr.mxu0 0.0
    %1697 = vmatpush1.msra.mxu0 %v315
    %1698 = vmatprep.subr.mxu0 0.0
    %1699 = vmatpush1.msra.mxu0 %v316
    %1700 = vmatprep.subr.mxu0 0.0
    %1701 = vmatpush1.msra.mxu0 %v317
    %1702 = vmatprep.subr.mxu0 0.0
    %1703 = vmatpush1.msra.mxu0 %v318
    %1704 = vmatprep.subr.mxu0 0.0
    %1705 = vmatpush1.msra.mxu0 %v319
    %1706 = vmatprep.subr.mxu0 0.0
    %1707 = vmatpush1.msra.mxu0 %v320
    %1708 = vmatprep.subr.mxu0 0.0
    %1709 = vmatpush1.msra.mxu0 %v321
    %1710 = vmatprep.subr.mxu0 0.0
    %1711 = vmatpush1.msra.mxu0 %v322
    %1712 = vmatprep.subr.mxu0 0.0
    %1713 = vmatpush1.msra.mxu0 %v323
    %1714 = vmatprep.subr.mxu0 0.0
    %1715 = vmatpush1.msra.mxu0 %v324
    %1716 = vmatprep.subr.mxu0 0.0
    %1717 = vmatpush1.msra.mxu0 %v325
    %1718 = vmatprep.subr.mxu0 0.0
    %1719 = vmatpush1.msra.mxu0 %v326
    %1720 = vmatprep.subr.mxu0 0.0
    %1721 = vmatpush1.msra.mxu0 %v327
    %1722 = vmatprep.subr.mxu0 0.0
    %1723 = vmatpush1.msra.mxu0 %v328
    %1724 = vmatprep.subr.mxu0 0.0
    %1725 = vmatpush1.msra.mxu0 %v329
    %1726 = vmatprep.subr.mxu0 0.0
    %1727 = vmatpush1.msra.mxu0 %v330
    %1728 = vmatprep.subr.mxu0 0.0
    %1729 = vmatpush1.msra.mxu0 %v331
    %1730 = vmatprep.subr.mxu0 0.0
    %1731 = vmatpush1.msra.mxu0 %v332
    %1732 = vmatprep.subr.mxu0 0.0
    %1733 = vmatpush1.msra.mxu0 %v333
    %1734 = vmatprep.subr.mxu0 0.0
    %1735 = vmatpush1.msra.mxu0 %v334
    %1736 = vmatprep.subr.mxu0 0.0
    %1737 = vmatpush1.msra.mxu0 %v335
    %1738 = vmatprep.subr.mxu0 0.0
    %1739 = vmatpush1.msra.mxu0 %v336
    %1740 = vmatprep.subr.mxu0 0.0
    %1741 = vmatpush1.msra.mxu0 %v337
    %1742 = vmatprep.subr.mxu0 0.0
    %1743 = vmatpush1.msra.mxu0 %v338
    %1744 = vmatprep.subr.mxu0 0.0
    %1745 = vmatpush1.msra.mxu0 %v339
    %1746 = vmatprep.subr.mxu0 0.0
    %1747 = vmatpush1.msra.mxu0 %v340
    %1748 = vmatprep.subr.mxu0 0.0
    %1749 = vmatpush1.msra.mxu0 %v341
    %1750 = vmatprep.subr.mxu0 0.0
    %1751 = vmatpush1.msra.mxu0 %v342
    %1752 = vmatprep.subr.mxu0 0.0
    %1753 = vmatpush1.msra.mxu0 %v343
    %1754 = vmatprep.subr.mxu0 0.0
    %1755 = vmatpush1.msra.mxu0 %v344
    %1756 = vmatprep.subr.mxu0 0.0
    %1757 = vmatpush1.msra.mxu0 %v345
    %1758 = vmatprep.subr.mxu0 0.0
    %1759 = vmatpush1.msra.mxu0 %v346
    %1760 = vmatprep.mubr.f32.mxu0 %v898
    %1761 = vmatmul.mubr.f32.gmra.mrb[0].mxu0 %v896
    %v1762 = vpop.f32.mrb[0].mxu0
    %v1763 = vadd.f32 %v1693, %v1762
    %v1764 = vpop.f32.mrb[0].mxu0
    %1765 = vdwg.mxu0
    %1766 = vmatprep.subr.mxu0 0.0
    %1767 = vmatpush1.msra.mxu0 %v347
    %1768 = vmatprep.subr.mxu0 0.0
    %1769 = vmatpush1.msra.mxu0 %v348
    %1770 = vmatprep.subr.mxu0 0.0
    %1771 = vmatpush1.msra.mxu0 %v349
    %1772 = vmatprep.subr.mxu0 0.0
    %1773 = vmatpush1.msra.mxu0 %v350
    %1774 = vmatprep.subr.mxu0 0.0
    %1775 = vmatpush1.msra.mxu0 %v351
    %1776 = vmatprep.subr.mxu0 0.0
    %1777 = vmatpush1.msra.mxu0 %v352
    %1778 = vmatprep.subr.mxu0 0.0
    %1779 = vmatpush1.msra.mxu0 %v353
    %1780 = vmatprep.subr.mxu0 0.0
    %1781 = vmatpush1.msra.mxu0 %v354
    %1782 = vmatprep.subr.mxu0 0.0
    %1783 = vmatpush1.msra.mxu0 %v355
    %1784 = vmatprep.subr.mxu0 0.0
    %1785 = vmatpush1.msra.mxu0 %v356
    %1786 = vmatprep.subr.mxu0 0.0
    %1787 = vmatpush1.msra.mxu0 %v357
    %1788 = vmatprep.subr.mxu0 0.0
    %1789 = vmatpush1.msra.mxu0 %v358
    %1790 = vmatprep.subr.mxu0 0.0
    %1791 = vmatpush1.msra.mxu0 %v359
    %1792 = vmatprep.subr.mxu0 0.0
    %1793 = vmatpush1.msra.mxu0 %v360
    %1794 = vmatprep.subr.mxu0 0.0
    %1795 = vmatpush1.msra.mxu0 %v361
    %1796 = vmatprep.subr.mxu0 0.0
    %1797 = vmatpush1.msra.mxu0 %v362
    %1798 = vmatprep.subr.mxu0 0.0
    %1799 = vmatpush1.msra.mxu0 %v363
    %1800 = vmatprep.subr.mxu0 0.0
    %1801 = vmatpush1.msra.mxu0 %v364
    %1802 = vmatprep.subr.mxu0 0.0
    %1803 = vmatpush1.msra.mxu0 %v365
    %1804 = vmatprep.subr.mxu0 0.0
    %1805 = vmatpush1.msra.mxu0 %v366
    %1806 = vmatprep.subr.mxu0 0.0
    %1807 = vmatpush1.msra.mxu0 %v367
    %1808 = vmatprep.subr.mxu0 0.0
    %1809 = vmatpush1.msra.mxu0 %v368
    %1810 = vmatprep.subr.mxu0 0.0
    %1811 = vmatpush1.msra.mxu0 %v369
    %1812 = vmatprep.subr.mxu0 0.0
    %1813 = vmatpush1.msra.mxu0 %v370
    %1814 = vmatprep.subr.mxu0 0.0
    %1815 = vmatpush1.msra.mxu0 %v371
    %1816 = vmatprep.subr.mxu0 0.0
    %1817 = vmatpush1.msra.mxu0 %v372
    %1818 = vmatprep.subr.mxu0 0.0
    %1819 = vmatpush1.msra.mxu0 %v373
    %1820 = vmatprep.subr.mxu0 0.0
    %1821 = vmatpush1.msra.mxu0 %v374
    %1822 = vmatprep.subr.mxu0 0.0
    %1823 = vmatpush1.msra.mxu0 %v375
    %1824 = vmatprep.subr.mxu0 0.0
    %1825 = vmatpush1.msra.mxu0 %v376
    %1826 = vmatprep.subr.mxu0 0.0
    %1827 = vmatpush1.msra.mxu0 %v377
    %1828 = vmatprep.subr.mxu0 0.0
    %1829 = vmatpush1.msra.mxu0 %v378
    %1830 = vmatprep.mubr.f32.mxu0 %v914
    %1831 = vmatmul.mubr.f32.gmra.mrb[0].mxu0 %v906
    %v1832 = vpop.f32.mrb[0].mxu0
    %v1833 = vadd.f32 %v1763, %v1832
    %v1834 = vpop.f32.mrb[0].mxu0
    %1835 = vdwg.mxu0
    %1836 = vmatprep.subr.mxu0 0.0
    %1837 = vmatpush1.msra.mxu0 %v379
    %1838 = vmatprep.subr.mxu0 0.0
    %1839 = vmatpush1.msra.mxu0 %v380
    %1840 = vmatprep.subr.mxu0 0.0
    %1841 = vmatpush1.msra.mxu0 %v381
    %1842 = vmatprep.subr.mxu0 0.0
    %1843 = vmatpush1.msra.mxu0 %v382
    %1844 = vmatprep.subr.mxu0 0.0
    %1845 = vmatpush1.msra.mxu0 %v383
    %1846 = vmatprep.subr.mxu0 0.0
    %1847 = vmatpush1.msra.mxu0 %v384
    %1848 = vmatprep.subr.mxu0 0.0
    %1849 = vmatpush1.msra.mxu0 %v385
    %1850 = vmatprep.subr.mxu0 0.0
    %1851 = vmatpush1.msra.mxu0 %v386
    %1852 = vmatprep.subr.mxu0 0.0
    %1853 = vmatpush1.msra.mxu0 %v387
    %1854 = vmatprep.subr.mxu0 0.0
    %1855 = vmatpush1.msra.mxu0 %v388
    %1856 = vmatprep.subr.mxu0 0.0
    %1857 = vmatpush1.msra.mxu0 %v389
    %1858 = vmatprep.subr.mxu0 0.0
    %1859 = vmatpush1.msra.mxu0 %v390
    %1860 = vmatprep.subr.mxu0 0.0
    %1861 = vmatpush1.msra.mxu0 %v391
    %1862 = vmatprep.subr.mxu0 0.0
    %1863 = vmatpush1.msra.mxu0 %v392
    %1864 = vmatprep.subr.mxu0 0.0
    %1865 = vmatpush1.msra.mxu0 %v393
    %1866 = vmatprep.subr.mxu0 0.0
    %1867 = vmatpush1.msra.mxu0 %v394
    %1868 = vmatprep.subr.mxu0 0.0
    %1869 = vmatpush1.msra.mxu0 %v395
    %1870 = vmatprep.subr.mxu0 0.0
    %1871 = vmatpush1.msra.mxu0 %v396
    %1872 = vmatprep.subr.mxu0 0.0
    %1873 = vmatpush1.msra.mxu0 %v397
    %1874 = vmatprep.subr.mxu0 0.0
    %1875 = vmatpush1.msra.mxu0 %v398
    %1876 = vmatprep.subr.mxu0 0.0
    %1877 = vmatpush1.msra.mxu0 %v399
    %1878 = vmatprep.subr.mxu0 0.0
    %1879 = vmatpush1.msra.mxu0 %v400
    %1880 = vmatprep.subr.mxu0 0.0
    %1881 = vmatpush1.msra.mxu0 %v401
    %1882 = vmatprep.subr.mxu0 0.0
    %1883 = vmatpush1.msra.mxu0 %v402
    %1884 = vmatprep.subr.mxu0 0.0
    %1885 = vmatpush1.msra.mxu0 %v403
    %1886 = vmatprep.subr.mxu0 0.0
    %1887 = vmatpush1.msra.mxu0 %v404
    %1888 = vmatprep.subr.mxu0 0.0
    %1889 = vmatpush1.msra.mxu0 %v405
    %1890 = vmatprep.subr.mxu0 0.0
    %1891 = vmatpush1.msra.mxu0 %v406
    %1892 = vmatprep.subr.mxu0 0.0
    %1893 = vmatpush1.msra.mxu0 %v407
    %1894 = vmatprep.subr.mxu0 0.0
    %1895 = vmatpush1.msra.mxu0 %v408
    %1896 = vmatprep.subr.mxu0 0.0
    %1897 = vmatpush1.msra.mxu0 %v409
    %1898 = vmatprep.subr.mxu0 0.0
    %1899 = vmatpush1.msra.mxu0 %v410
    %1900 = vmatprep.mubr.f32.mxu0 %v915
    %1901 = vmatmul.mubr.f32.gmra.mrb[0].mxu0 %v913
    %v1902 = vpop.f32.mrb[0].mxu0
    %v1903 = vadd.f32 %v1833, %v1902
    %v1904 = vpop.f32.mrb[0].mxu0
    %1905 = vdwg.mxu0
    %1906 = vmatprep.subr.mxu0 0.0
    %1907 = vmatpush1.msra.mxu0 %v411
    %1908 = vmatprep.subr.mxu0 0.0
    %1909 = vmatpush1.msra.mxu0 %v412
    %1910 = vmatprep.subr.mxu0 0.0
    %1911 = vmatpush1.msra.mxu0 %v413
    %1912 = vmatprep.subr.mxu0 0.0
    %1913 = vmatpush1.msra.mxu0 %v414
    %1914 = vmatprep.subr.mxu0 0.0
    %1915 = vmatpush1.msra.mxu0 %v415
    %1916 = vmatprep.subr.mxu0 0.0
    %1917 = vmatpush1.msra.mxu0 %v416
    %1918 = vmatprep.subr.mxu0 0.0
    %1919 = vmatpush1.msra.mxu0 %v417
    %1920 = vmatprep.subr.mxu0 0.0
    %1921 = vmatpush1.msra.mxu0 %v418
    %1922 = vmatprep.subr.mxu0 0.0
    %1923 = vmatpush1.msra.mxu0 %v419
    %1924 = vmatprep.subr.mxu0 0.0
    %1925 = vmatpush1.msra.mxu0 %v420
    %1926 = vmatprep.subr.mxu0 0.0
    %1927 = vmatpush1.msra.mxu0 %v421
    %1928 = vmatprep.subr.mxu0 0.0
    %1929 = vmatpush1.msra.mxu0 %v422
    %1930 = vmatprep.subr.mxu0 0.0
    %1931 = vmatpush1.msra.mxu0 %v423
    %1932 = vmatprep.subr.mxu0 0.0
    %1933 = vmatpush1.msra.mxu0 %v424
    %1934 = vmatprep.subr.mxu0 0.0
    %1935 = vmatpush1.msra.mxu0 %v425
    %1936 = vmatprep.subr.mxu0 0.0
    %1937 = vmatpush1.msra.mxu0 %v426
    %1938 = vmatprep.subr.mxu0 0.0
    %1939 = vmatpush1.msra.mxu0 %v427
    %1940 = vmatprep.subr.mxu0 0.0
    %1941 = vmatpush1.msra.mxu0 %v428
    %1942 = vmatprep.subr.mxu0 0.0
    %1943 = vmatpush1.msra.mxu0 %v429
    %1944 = vmatprep.subr.mxu0 0.0
    %1945 = vmatpush1.msra.mxu0 %v430
    %1946 = vmatprep.subr.mxu0 0.0
    %1947 = vmatpush1.msra.mxu0 %v431
    %1948 = vmatprep.subr.mxu0 0.0
    %1949 = vmatpush1.msra.mxu0 %v432
    %1950 = vmatprep.subr.mxu0 0.0
    %1951 = vmatpush1.msra.mxu0 %v433
    %1952 = vmatprep.subr.mxu0 0.0
    %1953 = vmatpush1.msra.mxu0 %v434
    %1954 = vmatprep.subr.mxu0 0.0
    %1955 = vmatpush1.msra.mxu0 %v435
    %1956 = vmatprep.subr.mxu0 0.0
    %1957 = vmatpush1.msra.mxu0 %v436
    %1958 = vmatprep.subr.mxu0 0.0
    %1959 = vmatpush1.msra.mxu0 %v437
    %1960 = vmatprep.subr.mxu0 0.0
    %1961 = vmatpush1.msra.mxu0 %v438
    %1962 = vmatprep.subr.mxu0 0.0
    %1963 = vmatpush1.msra.mxu0 %v439
    %1964 = vmatprep.subr.mxu0 0.0
    %1965 = vmatpush1.msra.mxu0 %v440
    %1966 = vmatprep.subr.mxu0 0.0
    %1967 = vmatpush1.msra.mxu0 %v441
    %1968 = vmatprep.subr.mxu0 0.0
    %1969 = vmatpush1.msra.mxu0 %v442
    %1970 = vmatprep.mubr.f32.mxu0 %v931
    %1971 = vmatmul.mubr.f32.gmra.mrb[0].mxu0 %v923
    %v1972 = vpop.f32.mrb[0].mxu0
    %v1973 = vadd.f32 %v1903, %v1972
    %v1974 = vpop.f32.mrb[0].mxu0
    %1975 = vdwg.mxu0
    %1976 = vmatprep.subr.mxu0 0.0
    %1977 = vmatpush1.msra.mxu0 %v443
    %1978 = vmatprep.subr.mxu0 0.0
    %1979 = vmatpush1.msra.mxu0 %v444
    %1980 = vmatprep.subr.mxu0 0.0
    %1981 = vmatpush1.msra.mxu0 %v445
    %1982 = vmatprep.subr.mxu0 0.0
    %1983 = vmatpush1.msra.mxu0 %v446
    %1984 = vmatprep.subr.mxu0 0.0
    %1985 = vmatpush1.msra.mxu0 %v447
    %1986 = vmatprep.subr.mxu0 0.0
    %1987 = vmatpush1.msra.mxu0 %v448
    %1988 = vmatprep.subr.mxu0 0.0
    %1989 = vmatpush1.msra.mxu0 %v449
    %1990 = vmatprep.subr.mxu0 0.0
    %1991 = vmatpush1.msra.mxu0 %v450
    %1992 = vmatprep.subr.mxu0 0.0
    %1993 = vmatpush1.msra.mxu0 %v451
    %1994 = vmatprep.subr.mxu0 0.0
    %1995 = vmatpush1.msra.mxu0 %v452
    %1996 = vmatprep.subr.mxu0 0.0
    %1997 = vmatpush1.msra.mxu0 %v453
    %1998 = vmatprep.subr.mxu0 0.0
    %1999 = vmatpush1.msra.mxu0 %v454
    %2000 = vmatprep.subr.mxu0 0.0
    %2001 = vmatpush1.msra.mxu0 %v455
    %2002 = vmatprep.subr.mxu0 0.0
    %2003 = vmatpush1.msra.mxu0 %v456
    %2004 = vmatprep.subr.mxu0 0.0
    %2005 = vmatpush1.msra.mxu0 %v457
    %2006 = vmatprep.subr.mxu0 0.0
    %2007 = vmatpush1.msra.mxu0 %v458
    %2008 = vmatprep.subr.mxu0 0.0
    %2009 = vmatpush1.msra.mxu0 %v459
    %2010 = vmatprep.subr.mxu0 0.0
    %2011 = vmatpush1.msra.mxu0 %v460
    %2012 = vmatprep.subr.mxu0 0.0
    %2013 = vmatpush1.msra.mxu0 %v461
    %2014 = vmatprep.subr.mxu0 0.0
    %2015 = vmatpush1.msra.mxu0 %v462
    %2016 = vmatprep.subr.mxu0 0.0
    %2017 = vmatpush1.msra.mxu0 %v463
    %2018 = vmatprep.subr.mxu0 0.0
    %2019 = vmatpush1.msra.mxu0 %v464
    %2020 = vmatprep.subr.mxu0 0.0
    %2021 = vmatpush1.msra.mxu0 %v465
    %2022 = vmatprep.subr.mxu0 0.0
    %2023 = vmatpush1.msra.mxu0 %v466
    %2024 = vmatprep.subr.mxu0 0.0
    %2025 = vmatpush1.msra.mxu0 %v467
    %2026 = vmatprep.subr.mxu0 0.0
    %2027 = vmatpush1.msra.mxu0 %v468
    %2028 = vmatprep.subr.mxu0 0.0
    %2029 = vmatpush1.msra.mxu0 %v469
    %2030 = vmatprep.subr.mxu0 0.0
    %2031 = vmatpush1.msra.mxu0 %v470
    %2032 = vmatprep.subr.mxu0 0.0
    %2033 = vmatpush1.msra.mxu0 %v471
    %2034 = vmatprep.subr.mxu0 0.0
    %2035 = vmatpush1.msra.mxu0 %v472
    %2036 = vmatprep.subr.mxu0 0.0
    %2037 = vmatpush1.msra.mxu0 %v473
    %2038 = vmatprep.subr.mxu0 0.0
    %2039 = vmatpush1.msra.mxu0 %v474
    %2040 = vmatprep.mubr.f32.mxu0 %v932
    %2041 = vmatmul.mubr.f32.gmra.mrb[0].mxu0 %v930
    %v2042 = vpop.f32.mrb[0].mxu0
    %v2043 = vadd.f32 %v1973, %v2042
    %v2044 = vpop.f32.mrb[0].mxu0
    %2045 = vdwg.mxu0
    %2046 = vmatprep.subr.mxu0 0.0
    %2047 = vmatpush1.msra.mxu0 %v475
    %2048 = vmatprep.subr.mxu0 0.0
    %2049 = vmatpush1.msra.mxu0 %v476
    %2050 = vmatprep.subr.mxu0 0.0
    %2051 = vmatpush1.msra.mxu0 %v477
    %2052 = vmatprep.subr.mxu0 0.0
    %2053 = vmatpush1.msra.mxu0 %v478
    %2054 = vmatprep.subr.mxu0 0.0
    %2055 = vmatpush1.msra.mxu0 %v479
    %2056 = vmatprep.subr.mxu0 0.0
    %2057 = vmatpush1.msra.mxu0 %v480
    %2058 = vmatprep.subr.mxu0 0.0
    %2059 = vmatpush1.msra.mxu0 %v481
    %2060 = vmatprep.subr.mxu0 0.0
    %2061 = vmatpush1.msra.mxu0 %v482
    %2062 = vmatprep.subr.mxu0 0.0
    %2063 = vmatpush1.msra.mxu0 %v483
    %2064 = vmatprep.subr.mxu0 0.0
    %2065 = vmatpush1.msra.mxu0 %v484
    %2066 = vmatprep.subr.mxu0 0.0
    %2067 = vmatpush1.msra.mxu0 %v485
    %2068 = vmatprep.subr.mxu0 0.0
    %2069 = vmatpush1.msra.mxu0 %v486
    %2070 = vmatprep.subr.mxu0 0.0
    %2071 = vmatpush1.msra.mxu0 %v487
    %2072 = vmatprep.subr.mxu0 0.0
    %2073 = vmatpush1.msra.mxu0 %v488
    %2074 = vmatprep.subr.mxu0 0.0
    %2075 = vmatpush1.msra.mxu0 %v489
    %2076 = vmatprep.subr.mxu0 0.0
    %2077 = vmatpush1.msra.mxu0 %v490
    %2078 = vmatprep.subr.mxu0 0.0
    %2079 = vmatpush1.msra.mxu0 %v491
    %2080 = vmatprep.subr.mxu0 0.0
    %2081 = vmatpush1.msra.mxu0 %v492
    %2082 = vmatprep.subr.mxu0 0.0
    %2083 = vmatpush1.msra.mxu0 %v493
    %2084 = vmatprep.subr.mxu0 0.0
    %2085 = vmatpush1.msra.mxu0 %v494
    %2086 = vmatprep.subr.mxu0 0.0
    %2087 = vmatpush1.msra.mxu0 %v495
    %2088 = vmatprep.subr.mxu0 0.0
    %2089 = vmatpush1.msra.mxu0 %v496
    %2090 = vmatprep.subr.mxu0 0.0
    %2091 = vmatpush1.msra.mxu0 %v497
    %2092 = vmatprep.subr.mxu0 0.0
    %2093 = vmatpush1.msra.mxu0 %v498
    %2094 = vmatprep.subr.mxu0 0.0
    %2095 = vmatpush1.msra.mxu0 %v499
    %2096 = vmatprep.subr.mxu0 0.0
    %2097 = vmatpush1.msra.mxu0 %v500
    %2098 = vmatprep.subr.mxu0 0.0
    %2099 = vmatpush1.msra.mxu0 %v501
    %2100 = vmatprep.subr.mxu0 0.0
    %2101 = vmatpush1.msra.mxu0 %v502
    %2102 = vmatprep.subr.mxu0 0.0
    %2103 = vmatpush1.msra.mxu0 %v503
    %2104 = vmatprep.subr.mxu0 0.0
    %2105 = vmatpush1.msra.mxu0 %v504
    %2106 = vmatprep.subr.mxu0 0.0
    %2107 = vmatpush1.msra.mxu0 %v505
    %2108 = vmatprep.subr.mxu0 0.0
    %2109 = vmatpush1.msra.mxu0 %v506
    %2110 = vmatprep.mubr.f32.mxu0 %v948
    %2111 = vmatmul.mubr.f32.gmra.mrb[0].mxu0 %v940
    %v2112 = vpop.f32.mrb[0].mxu0
    %v2113 = vadd.f32 %v2043, %v2112
    %v2114 = vpop.f32.mrb[0].mxu0
    %2115 = vdwg.mxu0
    %2116 = vmatprep.subr.mxu0 0.0
    %2117 = vmatpush1.msra.mxu0 %v507
    %2118 = vmatprep.subr.mxu0 0.0
    %2119 = vmatpush1.msra.mxu0 %v508
    %2120 = vmatprep.subr.mxu0 0.0
    %2121 = vmatpush1.msra.mxu0 %v509
    %2122 = vmatprep.subr.mxu0 0.0
    %2123 = vmatpush1.msra.mxu0 %v510
    %2124 = vmatprep.subr.mxu0 0.0
    %2125 = vmatpush1.msra.mxu0 %v511
    %2126 = vmatprep.subr.mxu0 0.0
    %2127 = vmatpush1.msra.mxu0 %v512
    %2128 = vmatprep.subr.mxu0 0.0
    %2129 = vmatpush1.msra.mxu0 %v513
    %2130 = vmatprep.subr.mxu0 0.0
    %2131 = vmatpush1.msra.mxu0 %v514
    %2132 = vmatprep.subr.mxu0 0.0
    %2133 = vmatpush1.msra.mxu0 %v515
    %2134 = vmatprep.subr.mxu0 0.0
    %2135 = vmatpush1.msra.mxu0 %v516
    %2136 = vmatprep.subr.mxu0 0.0
    %2137 = vmatpush1.msra.mxu0 %v517
    %2138 = vmatprep.subr.mxu0 0.0
    %2139 = vmatpush1.msra.mxu0 %v518
    %2140 = vmatprep.subr.mxu0 0.0
    %2141 = vmatpush1.msra.mxu0 %v519
    %2142 = vmatprep.subr.mxu0 0.0
    %2143 = vmatpush1.msra.mxu0 %v520
    %2144 = vmatprep.subr.mxu0 0.0
    %2145 = vmatpush1.msra.mxu0 %v521
    %2146 = vmatprep.subr.mxu0 0.0
    %2147 = vmatpush1.msra.mxu0 %v522
    %2148 = vmatprep.subr.mxu0 0.0
    %2149 = vmatpush1.msra.mxu0 %v523
    %2150 = vmatprep.subr.mxu0 0.0
    %2151 = vmatpush1.msra.mxu0 %v524
    %2152 = vmatprep.subr.mxu0 0.0
    %2153 = vmatpush1.msra.mxu0 %v525
    %2154 = vmatprep.subr.mxu0 0.0
    %2155 = vmatpush1.msra.mxu0 %v526
    %2156 = vmatprep.subr.mxu0 0.0
    %2157 = vmatpush1.msra.mxu0 %v527
    %2158 = vmatprep.subr.mxu0 0.0
    %2159 = vmatpush1.msra.mxu0 %v528
    %2160 = vmatprep.subr.mxu0 0.0
    %2161 = vmatpush1.msra.mxu0 %v529
    %2162 = vmatprep.subr.mxu0 0.0
    %2163 = vmatpush1.msra.mxu0 %v530
    %2164 = vmatprep.subr.mxu0 0.0
    %2165 = vmatpush1.msra.mxu0 %v531
    %2166 = vmatprep.subr.mxu0 0.0
    %2167 = vmatpush1.msra.mxu0 %v532
    %2168 = vmatprep.subr.mxu0 0.0
    %2169 = vmatpush1.msra.mxu0 %v533
    %2170 = vmatprep.subr.mxu0 0.0
    %2171 = vmatpush1.msra.mxu0 %v534
    %2172 = vmatprep.subr.mxu0 0.0
    %2173 = vmatpush1.msra.mxu0 %v535
    %2174 = vmatprep.subr.mxu0 0.0
    %2175 = vmatpush1.msra.mxu0 %v536
    %2176 = vmatprep.subr.mxu0 0.0
    %2177 = vmatpush1.msra.mxu0 %v537
    %2178 = vmatprep.subr.mxu0 0.0
    %2179 = vmatpush1.msra.mxu0 %v538
    %2180 = vmatprep.mubr.f32.mxu0 %v949
    %2181 = vmatmul.mubr.f32.gmra.mrb[0].mxu0 %v947
    %v2182 = vpop.f32.mrb[0].mxu0
    %v2183 = vadd.f32 %v2113, %v2182
    %v2184 = vpop.f32.mrb[0].mxu0
    %2185 = vdwg.mxu0
    %2186 = vmatprep.subr.mxu0 0.0
    %2187 = vmatpush1.msra.mxu0 %v539
    %2188 = vmatprep.subr.mxu0 0.0
    %2189 = vmatpush1.msra.mxu0 %v540
    %2190 = vmatprep.subr.mxu0 0.0
    %2191 = vmatpush1.msra.mxu0 %v541
    %2192 = vmatprep.subr.mxu0 0.0
    %2193 = vmatpush1.msra.mxu0 %v542
    %2194 = vmatprep.subr.mxu0 0.0
    %2195 = vmatpush1.msra.mxu0 %v543
    %2196 = vmatprep.subr.mxu0 0.0
    %2197 = vmatpush1.msra.mxu0 %v544
    %2198 = vmatprep.subr.mxu0 0.0
    %2199 = vmatpush1.msra.mxu0 %v545
    %2200 = vmatprep.subr.mxu0 0.0
    %2201 = vmatpush1.msra.mxu0 %v546
    %2202 = vmatprep.subr.mxu0 0.0
    %2203 = vmatpush1.msra.mxu0 %v547
    %2204 = vmatprep.subr.mxu0 0.0
    %2205 = vmatpush1.msra.mxu0 %v548
    %2206 = vmatprep.subr.mxu0 0.0
    %2207 = vmatpush1.msra.mxu0 %v549
    %2208 = vmatprep.subr.mxu0 0.0
    %2209 = vmatpush1.msra.mxu0 %v550
    %2210 = vmatprep.subr.mxu0 0.0
    %2211 = vmatpush1.msra.mxu0 %v551
    %2212 = vmatprep.subr.mxu0 0.0
    %2213 = vmatpush1.msra.mxu0 %v552
    %2214 = vmatprep.subr.mxu0 0.0
    %2215 = vmatpush1.msra.mxu0 %v553
    %2216 = vmatprep.subr.mxu0 0.0
    %2217 = vmatpush1.msra.mxu0 %v554
    %2218 = vmatprep.subr.mxu0 0.0
    %2219 = vmatpush1.msra.mxu0 %v555
    %2220 = vmatprep.subr.mxu0 0.0
    %2221 = vmatpush1.msra.mxu0 %v556
    %2222 = vmatprep.subr.mxu0 0.0
    %2223 = vmatpush1.msra.mxu0 %v557
    %2224 = vmatprep.subr.mxu0 0.0
    %2225 = vmatpush1.msra.mxu0 %v558
    %2226 = vmatprep.subr.mxu0 0.0
    %2227 = vmatpush1.msra.mxu0 %v559
    %2228 = vmatprep.subr.mxu0 0.0
    %2229 = vmatpush1.msra.mxu0 %v560
    %2230 = vmatprep.subr.mxu0 0.0
    %2231 = vmatpush1.msra.mxu0 %v561
    %2232 = vmatprep.subr.mxu0 0.0
    %2233 = vmatpush1.msra.mxu0 %v562
    %2234 = vmatprep.subr.mxu0 0.0
    %2235 = vmatpush1.msra.mxu0 %v563
    %2236 = vmatprep.subr.mxu0 0.0
    %2237 = vmatpush1.msra.mxu0 %v564
    %2238 = vmatprep.subr.mxu0 0.0
    %2239 = vmatpush1.msra.mxu0 %v565
    %2240 = vmatprep.subr.mxu0 0.0
    %2241 = vmatpush1.msra.mxu0 %v566
    %2242 = vmatprep.subr.mxu0 0.0
    %2243 = vmatpush1.msra.mxu0 %v567
    %2244 = vmatprep.subr.mxu0 0.0
    %2245 = vmatpush1.msra.mxu0 %v568
    %2246 = vmatprep.subr.mxu0 0.0
    %2247 = vmatpush1.msra.mxu0 %v569
    %2248 = vmatprep.subr.mxu0 0.0
    %2249 = vmatpush1.msra.mxu0 %v570
    %2250 = vmatprep.mubr.f32.mxu0 %v965
    %2251 = vmatmul.mubr.f32.gmra.mrb[0].mxu0 %v957
    %v2252 = vpop.f32.mrb[0].mxu0
    %v2253 = vadd.f32 %v2183, %v2252
    %v2254 = vpop.f32.mrb[0].mxu0
    %2255 = vdwg.mxu0
    %2256 = vmatprep.subr.mxu0 0.0
    %2257 = vmatpush1.msra.mxu0 %v571
    %2258 = vmatprep.subr.mxu0 0.0
    %2259 = vmatpush1.msra.mxu0 %v572
    %2260 = vmatprep.subr.mxu0 0.0
    %2261 = vmatpush1.msra.mxu0 %v573
    %2262 = vmatprep.subr.mxu0 0.0
    %2263 = vmatpush1.msra.mxu0 %v574
    %2264 = vmatprep.subr.mxu0 0.0
    %2265 = vmatpush1.msra.mxu0 %v575
    %2266 = vmatprep.subr.mxu0 0.0
    %2267 = vmatpush1.msra.mxu0 %v576
    %2268 = vmatprep.subr.mxu0 0.0
    %2269 = vmatpush1.msra.mxu0 %v577
    %2270 = vmatprep.subr.mxu0 0.0
    %2271 = vmatpush1.msra.mxu0 %v578
    %2272 = vmatprep.subr.mxu0 0.0
    %2273 = vmatpush1.msra.mxu0 %v579
    %2274 = vmatprep.subr.mxu0 0.0
    %2275 = vmatpush1.msra.mxu0 %v580
    %2276 = vmatprep.subr.mxu0 0.0
    %2277 = vmatpush1.msra.mxu0 %v581
    %2278 = vmatprep.subr.mxu0 0.0
    %2279 = vmatpush1.msra.mxu0 %v582
    %2280 = vmatprep.subr.mxu0 0.0
    %2281 = vmatpush1.msra.mxu0 %v583
    %2282 = vmatprep.subr.mxu0 0.0
    %2283 = vmatpush1.msra.mxu0 %v584
    %2284 = vmatprep.subr.mxu0 0.0
    %2285 = vmatpush1.msra.mxu0 %v585
    %2286 = vmatprep.subr.mxu0 0.0
    %2287 = vmatpush1.msra.mxu0 %v586
    %2288 = vmatprep.subr.mxu0 0.0
    %2289 = vmatpush1.msra.mxu0 %v587
    %2290 = vmatprep.subr.mxu0 0.0
    %2291 = vmatpush1.msra.mxu0 %v588
    %2292 = vmatprep.subr.mxu0 0.0
    %2293 = vmatpush1.msra.mxu0 %v589
    %2294 = vmatprep.subr.mxu0 0.0
    %2295 = vmatpush1.msra.mxu0 %v590
    %2296 = vmatprep.subr.mxu0 0.0
    %2297 = vmatpush1.msra.mxu0 %v591
    %2298 = vmatprep.subr.mxu0 0.0
    %2299 = vmatpush1.msra.mxu0 %v592
    %2300 = vmatprep.subr.mxu0 0.0
    %2301 = vmatpush1.msra.mxu0 %v593
    %2302 = vmatprep.subr.mxu0 0.0
    %2303 = vmatpush1.msra.mxu0 %v594
    %2304 = vmatprep.subr.mxu0 0.0
    %2305 = vmatpush1.msra.mxu0 %v595
    %2306 = vmatprep.subr.mxu0 0.0
    %2307 = vmatpush1.msra.mxu0 %v596
    %2308 = vmatprep.subr.mxu0 0.0
    %2309 = vmatpush1.msra.mxu0 %v597
    %2310 = vmatprep.subr.mxu0 0.0
    %2311 = vmatpush1.msra.mxu0 %v598
    %2312 = vmatprep.subr.mxu0 0.0
    %2313 = vmatpush1.msra.mxu0 %v599
    %2314 = vmatprep.subr.mxu0 0.0
    %2315 = vmatpush1.msra.mxu0 %v600
    %2316 = vmatprep.subr.mxu0 0.0
    %2317 = vmatpush1.msra.mxu0 %v601
    %2318 = vmatprep.subr.mxu0 0.0
    %2319 = vmatpush1.msra.mxu0 %v602
    %2320 = vmatprep.mubr.f32.mxu0 %v966
    %2321 = vmatmul.mubr.f32.gmra.mrb[0].mxu0 %v964
    %v2322 = vpop.f32.mrb[0].mxu0
    %v2323 = vadd.f32 %v2253, %v2322
    %v2324 = vpop.f32.mrb[0].mxu0
    %2325 = vdwg.mxu0
    %2326 = vmatprep.subr.mxu0 0.0
    %2327 = vmatpush1.msra.mxu0 %v603
    %2328 = vmatprep.subr.mxu0 0.0
    %2329 = vmatpush1.msra.mxu0 %v604
    %2330 = vmatprep.subr.mxu0 0.0
    %2331 = vmatpush1.msra.mxu0 %v605
    %2332 = vmatprep.subr.mxu0 0.0
    %2333 = vmatpush1.msra.mxu0 %v606
    %2334 = vmatprep.subr.mxu0 0.0
    %2335 = vmatpush1.msra.mxu0 %v607
    %2336 = vmatprep.subr.mxu0 0.0
    %2337 = vmatpush1.msra.mxu0 %v608
    %2338 = vmatprep.subr.mxu0 0.0
    %2339 = vmatpush1.msra.mxu0 %v609
    %2340 = vmatprep.subr.mxu0 0.0
    %2341 = vmatpush1.msra.mxu0 %v610
    %2342 = vmatprep.subr.mxu0 0.0
    %2343 = vmatpush1.msra.mxu0 %v611
    %2344 = vmatprep.subr.mxu0 0.0
    %2345 = vmatpush1.msra.mxu0 %v612
    %2346 = vmatprep.subr.mxu0 0.0
    %2347 = vmatpush1.msra.mxu0 %v613
    %2348 = vmatprep.subr.mxu0 0.0
    %2349 = vmatpush1.msra.mxu0 %v614
    %2350 = vmatprep.subr.mxu0 0.0
    %2351 = vmatpush1.msra.mxu0 %v615
    %2352 = vmatprep.subr.mxu0 0.0
    %2353 = vmatpush1.msra.mxu0 %v616
    %2354 = vmatprep.subr.mxu0 0.0
    %2355 = vmatpush1.msra.mxu0 %v617
    %2356 = vmatprep.subr.mxu0 0.0
    %2357 = vmatpush1.msra.mxu0 %v618
    %2358 = vmatprep.subr.mxu0 0.0
    %2359 = vmatpush1.msra.mxu0 %v619
    %2360 = vmatprep.subr.mxu0 0.0
    %2361 = vmatpush1.msra.mxu0 %v620
    %2362 = vmatprep.subr.mxu0 0.0
    %2363 = vmatpush1.msra.mxu0 %v621
    %2364 = vmatprep.subr.mxu0 0.0
    %2365 = vmatpush1.msra.mxu0 %v622
    %2366 = vmatprep.subr.mxu0 0.0
    %2367 = vmatpush1.msra.mxu0 %v623
    %2368 = vmatprep.subr.mxu0 0.0
    %2369 = vmatpush1.msra.mxu0 %v624
    %2370 = vmatprep.subr.mxu0 0.0
    %2371 = vmatpush1.msra.mxu0 %v625
    %2372 = vmatprep.subr.mxu0 0.0
    %2373 = vmatpush1.msra.mxu0 %v626
    %2374 = vmatprep.subr.mxu0 0.0
    %2375 = vmatpush1.msra.mxu0 %v627
    %2376 = vmatprep.subr.mxu0 0.0
    %2377 = vmatpush1.msra.mxu0 %v628
    %2378 = vmatprep.subr.mxu0 0.0
    %2379 = vmatpush1.msra.mxu0 %v629
    %2380 = vmatprep.subr.mxu0 0.0
    %2381 = vmatpush1.msra.mxu0 %v630
    %2382 = vmatprep.subr.mxu0 0.0
    %2383 = vmatpush1.msra.mxu0 %v631
    %2384 = vmatprep.subr.mxu0 0.0
    %2385 = vmatpush1.msra.mxu0 %v632
    %2386 = vmatprep.subr.mxu0 0.0
    %2387 = vmatpush1.msra.mxu0 %v633
    %2388 = vmatprep.subr.mxu0 0.0
    %2389 = vmatpush1.msra.mxu0 %v634
    %2390 = vmatprep.mubr.f32.mxu0 %v982
    %2391 = vmatmul.mubr.f32.gmra.mrb[0].mxu0 %v974
    %v2392 = vpop.f32.mrb[0].mxu0
    %v2393 = vadd.f32 %v2323, %v2392
    %v2394 = vpop.f32.mrb[0].mxu0
    %2395 = vdwg.mxu0
    %2396 = vmatprep.subr.mxu0 0.0
    %2397 = vmatpush1.msra.mxu0 %v635
    %2398 = vmatprep.subr.mxu0 0.0
    %2399 = vmatpush1.msra.mxu0 %v636
    %2400 = vmatprep.subr.mxu0 0.0
    %2401 = vmatpush1.msra.mxu0 %v637
    %2402 = vmatprep.subr.mxu0 0.0
    %2403 = vmatpush1.msra.mxu0 %v638
    %2404 = vmatprep.subr.mxu0 0.0
    %2405 = vmatpush1.msra.mxu0 %v639
    %2406 = vmatprep.subr.mxu0 0.0
    %2407 = vmatpush1.msra.mxu0 %v640
    %2408 = vmatprep.subr.mxu0 0.0
    %2409 = vmatpush1.msra.mxu0 %v641
    %2410 = vmatprep.subr.mxu0 0.0
    %2411 = vmatpush1.msra.mxu0 %v642
    %2412 = vmatprep.subr.mxu0 0.0
    %2413 = vmatpush1.msra.mxu0 %v643
    %2414 = vmatprep.subr.mxu0 0.0
    %2415 = vmatpush1.msra.mxu0 %v644
    %2416 = vmatprep.subr.mxu0 0.0
    %2417 = vmatpush1.msra.mxu0 %v645
    %2418 = vmatprep.subr.mxu0 0.0
    %2419 = vmatpush1.msra.mxu0 %v646
    %2420 = vmatprep.subr.mxu0 0.0
    %2421 = vmatpush1.msra.mxu0 %v647
    %2422 = vmatprep.subr.mxu0 0.0
    %2423 = vmatpush1.msra.mxu0 %v648
    %2424 = vmatprep.subr.mxu0 0.0
    %2425 = vmatpush1.msra.mxu0 %v649
    %2426 = vmatprep.subr.mxu0 0.0
    %2427 = vmatpush1.msra.mxu0 %v650
    %2428 = vmatprep.subr.mxu0 0.0
    %2429 = vmatpush1.msra.mxu0 %v651
    %2430 = vmatprep.subr.mxu0 0.0
    %2431 = vmatpush1.msra.mxu0 %v652
    %2432 = vmatprep.subr.mxu0 0.0
    %2433 = vmatpush1.msra.mxu0 %v653
    %2434 = vmatprep.subr.mxu0 0.0
    %2435 = vmatpush1.msra.mxu0 %v654
    %2436 = vmatprep.subr.mxu0 0.0
    %2437 = vmatpush1.msra.mxu0 %v655
    %2438 = vmatprep.subr.mxu0 0.0
    %2439 = vmatpush1.msra.mxu0 %v656
    %2440 = vmatprep.subr.mxu0 0.0
    %2441 = vmatpush1.msra.mxu0 %v657
    %2442 = vmatprep.subr.mxu0 0.0
    %2443 = vmatpush1.msra.mxu0 %v658
    %2444 = vmatprep.subr.mxu0 0.0
    %2445 = vmatpush1.msra.mxu0 %v659
    %2446 = vmatprep.subr.mxu0 0.0
    %2447 = vmatpush1.msra.mxu0 %v660
    %2448 = vmatprep.subr.mxu0 0.0
    %2449 = vmatpush1.msra.mxu0 %v661
    %2450 = vmatprep.subr.mxu0 0.0
    %2451 = vmatpush1.msra.mxu0 %v662
    %2452 = vmatprep.subr.mxu0 0.0
    %2453 = vmatpush1.msra.mxu0 %v663
    %2454 = vmatprep.subr.mxu0 0.0
    %2455 = vmatpush1.msra.mxu0 %v664
    %2456 = vmatprep.subr.mxu0 0.0
    %2457 = vmatpush1.msra.mxu0 %v665
    %2458 = vmatprep.subr.mxu0 0.0
    %2459 = vmatpush1.msra.mxu0 %v666
    %2460 = vmatprep.mubr.f32.mxu0 %v983
    %2461 = vmatmul.mubr.f32.gmra.mrb[0].mxu0 %v981
    %v2462 = vpop.f32.mrb[0].mxu0
    %v2463 = vadd.f32 %v2393, %v2462
    %v2464 = vpop.f32.mrb[0].mxu0
    %2465 = vdwg.mxu0
    %2466 = vmatprep.subr.mxu0 0.0
    %2467 = vmatpush1.msra.mxu0 %v667
    %2468 = vmatprep.subr.mxu0 0.0
    %2469 = vmatpush1.msra.mxu0 %v668
    %2470 = vmatprep.subr.mxu0 0.0
    %2471 = vmatpush1.msra.mxu0 %v669
    %2472 = vmatprep.subr.mxu0 0.0
    %2473 = vmatpush1.msra.mxu0 %v670
    %2474 = vmatprep.subr.mxu0 0.0
    %2475 = vmatpush1.msra.mxu0 %v671
    %2476 = vmatprep.subr.mxu0 0.0
    %2477 = vmatpush1.msra.mxu0 %v672
    %2478 = vmatprep.subr.mxu0 0.0
    %2479 = vmatpush1.msra.mxu0 %v673
    %2480 = vmatprep.subr.mxu0 0.0
    %2481 = vmatpush1.msra.mxu0 %v674
    %2482 = vmatprep.subr.mxu0 0.0
    %2483 = vmatpush1.msra.mxu0 %v675
    %2484 = vmatprep.subr.mxu0 0.0
    %2485 = vmatpush1.msra.mxu0 %v676
    %2486 = vmatprep.subr.mxu0 0.0
    %2487 = vmatpush1.msra.mxu0 %v677
    %2488 = vmatprep.subr.mxu0 0.0
    %2489 = vmatpush1.msra.mxu0 %v678
    %2490 = vmatprep.subr.mxu0 0.0
    %2491 = vmatpush1.msra.mxu0 %v679
    %2492 = vmatprep.subr.mxu0 0.0
    %2493 = vmatpush1.msra.mxu0 %v680
    %2494 = vmatprep.subr.mxu0 0.0
    %2495 = vmatpush1.msra.mxu0 %v681
    %2496 = vmatprep.subr.mxu0 0.0
    %2497 = vmatpush1.msra.mxu0 %v682
    %2498 = vmatprep.subr.mxu0 0.0
    %2499 = vmatpush1.msra.mxu0 %v683
    %2500 = vmatprep.subr.mxu0 0.0
    %2501 = vmatpush1.msra.mxu0 %v684
    %2502 = vmatprep.subr.mxu0 0.0
    %2503 = vmatpush1.msra.mxu0 %v685
    %2504 = vmatprep.subr.mxu0 0.0
    %2505 = vmatpush1.msra.mxu0 %v686
    %2506 = vmatprep.subr.mxu0 0.0
    %2507 = vmatpush1.msra.mxu0 %v687
    %2508 = vmatprep.subr.mxu0 0.0
    %2509 = vmatpush1.msra.mxu0 %v688
    %2510 = vmatprep.subr.mxu0 0.0
    %2511 = vmatpush1.msra.mxu0 %v689
    %2512 = vmatprep.subr.mxu0 0.0
    %2513 = vmatpush1.msra.mxu0 %v690
    %2514 = vmatprep.subr.mxu0 0.0
    %2515 = vmatpush1.msra.mxu0 %v691
    %2516 = vmatprep.subr.mxu0 0.0
    %2517 = vmatpush1.msra.mxu0 %v692
    %2518 = vmatprep.subr.mxu0 0.0
    %2519 = vmatpush1.msra.mxu0 %v693
    %2520 = vmatprep.subr.mxu0 0.0
    %2521 = vmatpush1.msra.mxu0 %v694
    %2522 = vmatprep.subr.mxu0 0.0
    %2523 = vmatpush1.msra.mxu0 %v695
    %2524 = vmatprep.subr.mxu0 0.0
    %2525 = vmatpush1.msra.mxu0 %v696
    %2526 = vmatprep.subr.mxu0 0.0
    %2527 = vmatpush1.msra.mxu0 %v697
    %2528 = vmatprep.subr.mxu0 0.0
    %2529 = vmatpush1.msra.mxu0 %v698
    %2530 = vmatprep.mubr.f32.mxu0 %v999
    %2531 = vmatmul.mubr.f32.gmra.mrb[0].mxu0 %v991
    %v2532 = vpop.f32.mrb[0].mxu0
    %v2533 = vadd.f32 %v2463, %v2532
    %v2534 = vpop.f32.mrb[0].mxu0
    %2535 = vdwg.mxu0
    %2536 = vmatprep.subr.mxu0 0.0
    %2537 = vmatpush1.msra.mxu0 %v699
    %2538 = vmatprep.subr.mxu0 0.0
    %2539 = vmatpush1.msra.mxu0 %v700
    %2540 = vmatprep.subr.mxu0 0.0
    %2541 = vmatpush1.msra.mxu0 %v701
    %2542 = vmatprep.subr.mxu0 0.0
    %2543 = vmatpush1.msra.mxu0 %v702
    %2544 = vmatprep.subr.mxu0 0.0
    %2545 = vmatpush1.msra.mxu0 %v703
    %2546 = vmatprep.subr.mxu0 0.0
    %2547 = vmatpush1.msra.mxu0 %v704
    %2548 = vmatprep.subr.mxu0 0.0
    %2549 = vmatpush1.msra.mxu0 %v705
    %2550 = vmatprep.subr.mxu0 0.0
    %2551 = vmatpush1.msra.mxu0 %v706
    %2552 = vmatprep.subr.mxu0 0.0
    %2553 = vmatpush1.msra.mxu0 %v707
    %2554 = vmatprep.subr.mxu0 0.0
    %2555 = vmatpush1.msra.mxu0 %v708
    %2556 = vmatprep.subr.mxu0 0.0
    %2557 = vmatpush1.msra.mxu0 %v709
    %2558 = vmatprep.subr.mxu0 0.0
    %2559 = vmatpush1.msra.mxu0 %v710
    %2560 = vmatprep.subr.mxu0 0.0
    %2561 = vmatpush1.msra.mxu0 %v711
    %2562 = vmatprep.subr.mxu0 0.0
    %2563 = vmatpush1.msra.mxu0 %v712
    %2564 = vmatprep.subr.mxu0 0.0
    %2565 = vmatpush1.msra.mxu0 %v713
    %2566 = vmatprep.subr.mxu0 0.0
    %2567 = vmatpush1.msra.mxu0 %v714
    %2568 = vmatprep.subr.mxu0 0.0
    %2569 = vmatpush1.msra.mxu0 %v715
    %2570 = vmatprep.subr.mxu0 0.0
    %2571 = vmatpush1.msra.mxu0 %v716
    %2572 = vmatprep.subr.mxu0 0.0
    %2573 = vmatpush1.msra.mxu0 %v717
    %2574 = vmatprep.subr.mxu0 0.0
    %2575 = vmatpush1.msra.mxu0 %v718
    %2576 = vmatprep.subr.mxu0 0.0
    %2577 = vmatpush1.msra.mxu0 %v719
    %2578 = vmatprep.subr.mxu0 0.0
    %2579 = vmatpush1.msra.mxu0 %v720
    %2580 = vmatprep.subr.mxu0 0.0
    %2581 = vmatpush1.msra.mxu0 %v721
    %2582 = vmatprep.subr.mxu0 0.0
    %2583 = vmatpush1.msra.mxu0 %v722
    %2584 = vmatprep.subr.mxu0 0.0
    %2585 = vmatpush1.msra.mxu0 %v723
    %2586 = vmatprep.subr.mxu0 0.0
    %2587 = vmatpush1.msra.mxu0 %v724
    %2588 = vmatprep.subr.mxu0 0.0
    %2589 = vmatpush1.msra.mxu0 %v725
    %2590 = vmatprep.subr.mxu0 0.0
    %2591 = vmatpush1.msra.mxu0 %v726
    %2592 = vmatprep.subr.mxu0 0.0
    %2593 = vmatpush1.msra.mxu0 %v727
    %2594 = vmatprep.subr.mxu0 0.0
    %2595 = vmatpush1.msra.mxu0 %v728
    %2596 = vmatprep.subr.mxu0 0.0
    %2597 = vmatpush1.msra.mxu0 %v729
    %2598 = vmatprep.subr.mxu0 0.0
    %2599 = vmatpush1.msra.mxu0 %v730
    %2600 = vmatprep.mubr.f32.mxu0 %v1000
    %2601 = vmatmul.mubr.f32.gmra.mrb[0].mxu0 %v998
    %v2602 = vpop.f32.mrb[0].mxu0
    %v2603 = vadd.f32 %v2533, %v2602
    %v2604 = vpop.f32.mrb[0].mxu0
    %2605 = vdwg.mxu0
    %2606 = vmatprep.subr.mxu0 0.0
    %2607 = vmatpush1.msra.mxu0 %v731
    %2608 = vmatprep.subr.mxu0 0.0
    %2609 = vmatpush1.msra.mxu0 %v732
    %2610 = vmatprep.subr.mxu0 0.0
    %2611 = vmatpush1.msra.mxu0 %v733
    %2612 = vmatprep.subr.mxu0 0.0
    %2613 = vmatpush1.msra.mxu0 %v734
    %2614 = vmatprep.subr.mxu0 0.0
    %2615 = vmatpush1.msra.mxu0 %v735
    %2616 = vmatprep.subr.mxu0 0.0
    %2617 = vmatpush1.msra.mxu0 %v736
    %2618 = vmatprep.subr.mxu0 0.0
    %2619 = vmatpush1.msra.mxu0 %v737
    %2620 = vmatprep.subr.mxu0 0.0
    %2621 = vmatpush1.msra.mxu0 %v738
    %2622 = vmatprep.subr.mxu0 0.0
    %2623 = vmatpush1.msra.mxu0 %v739
    %2624 = vmatprep.subr.mxu0 0.0
    %2625 = vmatpush1.msra.mxu0 %v740
    %2626 = vmatprep.subr.mxu0 0.0
    %2627 = vmatpush1.msra.mxu0 %v741
    %2628 = vmatprep.subr.mxu0 0.0
    %2629 = vmatpush1.msra.mxu0 %v742
    %2630 = vmatprep.subr.mxu0 0.0
    %2631 = vmatpush1.msra.mxu0 %v743
    %2632 = vmatprep.subr.mxu0 0.0
    %2633 = vmatpush1.msra.mxu0 %v744
    %2634 = vmatprep.subr.mxu0 0.0
    %2635 = vmatpush1.msra.mxu0 %v745
    %2636 = vmatprep.subr.mxu0 0.0
    %2637 = vmatpush1.msra.mxu0 %v746
    %2638 = vmatprep.subr.mxu0 0.0
    %2639 = vmatpush1.msra.mxu0 %v747
    %2640 = vmatprep.subr.mxu0 0.0
    %2641 = vmatpush1.msra.mxu0 %v748
    %2642 = vmatprep.subr.mxu0 0.0
    %2643 = vmatpush1.msra.mxu0 %v749
    %2644 = vmatprep.subr.mxu0 0.0
    %2645 = vmatpush1.msra.mxu0 %v750
    %2646 = vmatprep.subr.mxu0 0.0
    %2647 = vmatpush1.msra.mxu0 %v751
    %2648 = vmatprep.subr.mxu0 0.0
    %2649 = vmatpush1.msra.mxu0 %v752
    %2650 = vmatprep.subr.mxu0 0.0
    %2651 = vmatpush1.msra.mxu0 %v753
    %2652 = vmatprep.subr.mxu0 0.0
    %2653 = vmatpush1.msra.mxu0 %v754
    %2654 = vmatprep.subr.mxu0 0.0
    %2655 = vmatpush1.msra.mxu0 %v755
    %2656 = vmatprep.subr.mxu0 0.0
    %2657 = vmatpush1.msra.mxu0 %v756
    %2658 = vmatprep.subr.mxu0 0.0
    %2659 = vmatpush1.msra.mxu0 %v757
    %2660 = vmatprep.subr.mxu0 0.0
    %2661 = vmatpush1.msra.mxu0 %v758
    %2662 = vmatprep.subr.mxu0 0.0
    %2663 = vmatpush1.msra.mxu0 %v759
    %2664 = vmatprep.subr.mxu0 0.0
    %2665 = vmatpush1.msra.mxu0 %v760
    %2666 = vmatprep.subr.mxu0 0.0
    %2667 = vmatpush1.msra.mxu0 %v761
    %2668 = vmatprep.subr.mxu0 0.0
    %2669 = vmatpush1.msra.mxu0 %v762
    %2670 = vmatprep.mubr.f32.mxu0 %v1016
    %2671 = vmatmul.mubr.f32.gmra.mrb[0].mxu0 %v1008
    %v2672 = vpop.f32.mrb[0].mxu0
    %v2673 = vadd.f32 %v2603, %v2672
    %v2674 = vpop.f32.mrb[0].mxu0
    %2675 = vdwg.mxu0
    %2676 = vmatprep.subr.mxu0 0.0
    %2677 = vmatpush1.msra.mxu0 %v763
    %2678 = vmatprep.subr.mxu0 0.0
    %2679 = vmatpush1.msra.mxu0 %v764
    %2680 = vmatprep.subr.mxu0 0.0
    %2681 = vmatpush1.msra.mxu0 %v765
    %2682 = vmatprep.subr.mxu0 0.0
    %2683 = vmatpush1.msra.mxu0 %v766
    %2684 = vmatprep.subr.mxu0 0.0
    %2685 = vmatpush1.msra.mxu0 %v767
    %2686 = vmatprep.subr.mxu0 0.0
    %2687 = vmatpush1.msra.mxu0 %v768
    %2688 = vmatprep.subr.mxu0 0.0
    %2689 = vmatpush1.msra.mxu0 %v769
    %2690 = vmatprep.subr.mxu0 0.0
    %2691 = vmatpush1.msra.mxu0 %v770
    %2692 = vmatprep.subr.mxu0 0.0
    %2693 = vmatpush1.msra.mxu0 %v771
    %2694 = vmatprep.subr.mxu0 0.0
    %2695 = vmatpush1.msra.mxu0 %v772
    %2696 = vmatprep.subr.mxu0 0.0
    %2697 = vmatpush1.msra.mxu0 %v773
    %2698 = vmatprep.subr.mxu0 0.0
    %2699 = vmatpush1.msra.mxu0 %v774
    %2700 = vmatprep.subr.mxu0 0.0
    %2701 = vmatpush1.msra.mxu0 %v775
    %2702 = vmatprep.subr.mxu0 0.0
    %2703 = vmatpush1.msra.mxu0 %v776
    %2704 = vmatprep.subr.mxu0 0.0
    %2705 = vmatpush1.msra.mxu0 %v777
    %2706 = vmatprep.subr.mxu0 0.0
    %2707 = vmatpush1.msra.mxu0 %v778
    %2708 = vmatprep.subr.mxu0 0.0
    %2709 = vmatpush1.msra.mxu0 %v779
    %2710 = vmatprep.subr.mxu0 0.0
    %2711 = vmatpush1.msra.mxu0 %v780
    %2712 = vmatprep.subr.mxu0 0.0
    %2713 = vmatpush1.msra.mxu0 %v781
    %2714 = vmatprep.subr.mxu0 0.0
    %2715 = vmatpush1.msra.mxu0 %v782
    %2716 = vmatprep.subr.mxu0 0.0
    %2717 = vmatpush1.msra.mxu0 %v783
    %2718 = vmatprep.subr.mxu0 0.0
    %2719 = vmatpush1.msra.mxu0 %v784
    %2720 = vmatprep.subr.mxu0 0.0
    %2721 = vmatpush1.msra.mxu0 %v785
    %2722 = vmatprep.subr.mxu0 0.0
    %2723 = vmatpush1.msra.mxu0 %v786
    %2724 = vmatprep.subr.mxu0 0.0
    %2725 = vmatpush1.msra.mxu0 %v787
    %2726 = vmatprep.subr.mxu0 0.0
    %2727 = vmatpush1.msra.mxu0 %v788
    %2728 = vmatprep.subr.mxu0 0.0
    %2729 = vmatpush1.msra.mxu0 %v789
    %2730 = vmatprep.subr.mxu0 0.0
    %2731 = vmatpush1.msra.mxu0 %v790
    %2732 = vmatprep.subr.mxu0 0.0
    %2733 = vmatpush1.msra.mxu0 %v791
    %2734 = vmatprep.subr.mxu0 0.0
    %2735 = vmatpush1.msra.mxu0 %v792
    %2736 = vmatprep.subr.mxu0 0.0
    %2737 = vmatpush1.msra.mxu0 %v793
    %2738 = vmatprep.subr.mxu0 0.0
    %2739 = vmatpush1.msra.mxu0 %v794
    %2740 = vmatprep.mubr.f32.mxu0 %v1017
    %2741 = vmatmul.mubr.f32.gmra.mrb[0].mxu0 %v1015
    %v2742 = vpop.f32.mrb[0].mxu0
    %v2743 = vadd.f32 %v2673, %v2742
    %v2744 = vpop.f32.mrb[0].mxu0
    %2745 = vdwg.mxu0
    %vm2746 = vcmask 25600
    %2747 = vst.msk [vmem:[#allocation2] sm:$0x3] %vm2746, %v2743
    // Predicated region
    $region14: #{tpu_custom_call.1} parent=1 // pred_check
      _
    $region15: #{tpu_custom_call.1} parent=1 // pred_check_branch
      %2749 = sbr.rel (0) target = $region17
    $region16: #{tpu_custom_call.1} parent=1 // pred_region
      %s2751 = ssub.s32 32, 32
      %2752 = vsyncadd [#allocation3], %s2751
      %s2754 = sshll.u32 [#allocation2], 4
      %s2755 = int_to_ptr.vmem [resolvable:$true] %s2754
      %2757 = dma.vmem_to_hbm [thread:$0]  %s2755, 32, %s3, [#allocation3]
    $region17: #{tpu_custom_call.1} parent=1 // pred_fallthru
      _
    // Predicated region
    $region18: #{tpu_custom_call.1} parent=1 // pred_check
      _
    $region19: #{tpu_custom_call.1} parent=1 // pred_check_branch
      %2759 = sbr.rel (0) target = $region21
    $region20: #{tpu_custom_call.1} parent=1 // pred_region
      %2760 = dma.done [#allocation3], 32
    $region21: #{tpu_custom_call.1} parent=1 // pred_fallthru
      _
    %2761 = vsyncpa [#allocation3], 1

</llo_original>
